<compile_context>
chip_gen: v7x
topology: tpu7x:2x2x1
jax: 0.10.0
libtpu: 0.0.40
codegen_flags: <defaults>
</compile_context>

<pallas_src>
import functools

import jax
import jax.numpy as jnp
from jax.experimental import pallas as pl
from jax.experimental.pallas import tpu as pltpu


def _vae_kernel(x_ref, eps_ref,
                w1_ref, b1_ref, wenc_ref, benc_ref,
                w3_ref, b3_ref, w4_ref, b4_ref,
                recon_ref, packed_ref, *, b_lat, pack_w):
    # encoder: x (tb, N) bf16 @ w1 (N, 256) bf16 -> f32 accumulate
    h1 = jnp.dot(x_ref[...], w1_ref[...],
                 preferred_element_type=jnp.float32) + b1_ref[...]
    h1 = jnp.maximum(h1, 0.0)

    # fused mu/logvar head: (tb, 256) @ (256, 2*b) -> (tb, 2*b), enc = [mu | logvar]
    enc = jnp.dot(h1.astype(jnp.bfloat16), wenc_ref[...],
                  preferred_element_type=jnp.float32) + benc_ref[...]
    mu = enc[:, :b_lat]
    logvar = enc[:, b_lat:]

    # reparameterize (f32: EUP exp, VPU fma)
    std = jnp.exp(0.5 * logvar)
    z = eps_ref[...] * std + mu

    # decoder
    h3 = jnp.dot(z.astype(jnp.bfloat16), w3_ref[...],
                 preferred_element_type=jnp.float32) + b3_ref[...]
    h3 = jnp.maximum(h3, 0.0)
    recon = jnp.dot(h3.astype(jnp.bfloat16), w4_ref[...],
                    preferred_element_type=jnp.float32) + b4_ref[...]
    recon_ref[...] = recon.astype(recon_ref.dtype)   # bf16 writeback

    # Build the z|mu|logvar slab in registers and do ONE full-width lane-dense
    # store (no zero-fill + masked sub-lane stores).  enc already is [mu|logvar].
    pieces = [z, enc]
    pad = pack_w - 3 * b_lat
    if pad:
        pieces.append(jnp.zeros((z.shape[0], pad), jnp.float32))
    packed_ref[...] = jnp.concatenate(pieces, axis=1)


def shallow_vae_forward(x, eps, params, *, tb=None):
    """x: (B, N) bf16 (f32 accepted, cast here), eps: (B, b) f32,
    params: prepared/padded params (see prepare_params)."""
    B, N = x.shape
    b_lat = eps.shape[1]
    pack_w = max(128, pl.cdiv(3 * b_lat, 128) * 128)

    # x should arrive bf16 from the producer; cast defensively if it doesn't.
    if x.dtype != jnp.bfloat16:
        x = x.astype(jnp.bfloat16)

    if tb is None:
        # >=256 rows (fills 256-row MXU input on v6e/v7x), large enough to
        # amortize per-step overhead, capped at 2048 (keeps double-buffered
        # x/recon/packed tiles ~10 MiB), and >=2 grid steps when B allows so
        # v7x megacore can shard the batch axis.
        tb = max(256, min(2048, pl.next_power_of_2(max(B, 2)) // 2))

    # pad batch to a multiple of the batch tile
    B_pad = pl.cdiv(B, tb) * tb
    if B_pad != B:
        x = jnp.pad(x, ((0, B_pad - B), (0, 0)))
        eps = jnp.pad(eps, ((0, B_pad - B), (0, 0)))
    grid = (B_pad // tb,)

    weight_args = (params["w1"], params["b1"],
                   params["w_enc"], params["b_enc"],
                   params["w3"], params["b3"],
                   params["w4"], params["b4"])

    def const_spec(a):
        # full-extent block, constant index map -> stays VMEM-resident, no
        # re-DMA across grid steps.
        return pl.BlockSpec(a.shape, lambda i: (0,) * a.ndim)

    in_specs = [
        pl.BlockSpec((tb, N), lambda i: (i, 0)),        # x: batch-tiled (bf16)
        pl.BlockSpec((tb, b_lat), lambda i: (i, 0)),    # eps: batch-tiled (f32)
    ] + [const_spec(a) for a in weight_args]

    out_specs = (
        pl.BlockSpec((tb, N), lambda i: (i, 0)),        # recon (bf16)
        pl.BlockSpec((tb, pack_w), lambda i: (i, 0)),   # packed z|mu|logvar (f32)
    )
    out_shapes = (
        jax.ShapeDtypeStruct((B_pad, N), jnp.bfloat16),
        jax.ShapeDtypeStruct((B_pad, pack_w), jnp.float32),
    )

    recon, packed = pl.pallas_call(
        functools.partial(_vae_kernel, b_lat=b_lat, pack_w=pack_w),
        out_shape=out_shapes,
        grid=grid,
        in_specs=in_specs,
        out_specs=out_specs,
        compiler_params=pltpu.CompilerParams(
            dimension_semantics=("parallel",),     # megacore-shard batch on v7x
            vmem_limit_bytes=64 << 20),            # allow large batch tiles
    )(x, eps, *weight_args)

    z = packed[:B, 0 * b_lat:1 * b_lat]
    mu = packed[:B, 1 * b_lat:2 * b_lat]
    logvar = packed[:B, 2 * b_lat:3 * b_lat]
    return z, recon[:B], mu, logvar


def init_params(key, N, hidden, b_lat):
    """Deterministic synthetic init matching the nn.Linear shapes of ShallowVAE.

    Weights stored as (in, out) == W.T of torch's (out, in); biases as (1, out).
    """
    ks = jax.random.split(key, 10)

    def linear(kw, kb, d_in, d_out):
        scale = 1.0 / jnp.sqrt(jnp.float32(d_in))
        w = jax.random.uniform(kw, (d_in, d_out), jnp.float32, -scale, scale)
        bias = jax.random.uniform(kb, (1, d_out), jnp.float32, -scale, scale)
        return w, bias

    p = {}
    p["w1"], p["b1"] = linear(ks[0], ks[1], N, hidden)
    p["w21"], p["b21"] = linear(ks[2], ks[3], hidden, b_lat)
    p["w22"], p["b22"] = linear(ks[4], ks[5], hidden, b_lat)
    p["w3"], p["b3"] = linear(ks[6], ks[7], b_lat, hidden)
    p["w4"], p["b4"] = linear(ks[8], ks[9], hidden, N)
    return p


def prepare_params(p, hidden, h_pad):
    """Pad hidden -> h_pad (zeros), fuse mu/logvar head, cast weights to bf16."""
    dh = h_pad - hidden
    w1 = jnp.pad(p["w1"], ((0, 0), (0, dh)))                      # (N, 256)
    b1 = jnp.pad(p["b1"], ((0, 0), (0, dh)))                      # (1, 256)
    w_enc = jnp.concatenate([jnp.pad(p["w21"], ((0, dh), (0, 0))),
                             jnp.pad(p["w22"], ((0, dh), (0, 0)))], axis=1)  # (256, 2b)
    b_enc = jnp.concatenate([p["b21"], p["b22"]], axis=1)          # (1, 2b)
    w3 = jnp.pad(p["w3"], ((0, 0), (0, dh)))                       # (b, 256)
    b3 = jnp.pad(p["b3"], ((0, 0), (0, dh)))                       # (1, 256)
    w4 = jnp.pad(p["w4"], ((0, dh), (0, 0)))                       # (256, N)
    b4 = p["b4"]                                                   # (1, N)
    bf16 = jnp.bfloat16
    return dict(w1=w1.astype(bf16), b1=b1,
                w_enc=w_enc.astype(bf16), b_enc=b_enc,
                w3=w3.astype(bf16), b3=b3,
                w4=w4.astype(bf16), b4=b4)


def _reference(x, eps, pp, b_lat):
    """Pure-JAX reference using the same bf16-operand / f32-accumulate math."""
    def mm(a, w):
        return jnp.dot(a.astype(jnp.bfloat16), w, preferred_element_type=jnp.float32)

    h1 = jnp.maximum(mm(x, pp["w1"]) + pp["b1"], 0.0)
    enc = mm(h1, pp["w_enc"]) + pp["b_enc"]
    mu, logvar = enc[:, :b_lat], enc[:, b_lat:]
    z = eps * jnp.exp(0.5 * logvar) + mu
    h3 = jnp.maximum(mm(z, pp["w3"]) + pp["b3"], 0.0)
    recon = (mm(h3, pp["w4"]) + pp["b4"]).astype(jnp.bfloat16)
    return z, recon, mu, logvar


if __name__ == "__main__":
    # Module hyperparams: m=16, n=16 -> N=256 ; latent b=16 ; hidden=250 (fixed by module)
    m, n, b_lat, hidden = 16, 16, 16, 250
    N = m * n
    H_PAD = 256
    B = 512          # 2 grid steps at TB=256 -> weights amortize, v7x uses both TCs
    TB = 256         # batch tile per grid step (>=256 fills the 256-row MXU on v6e/v7x)

    key = jax.random.PRNGKey(0)
    k_x, k_eps, k_p = jax.random.split(key, 3)

    # x produced directly as bf16 (cast at the data producer, not in the wrapper)
    x = jax.random.normal(k_x, (B, N), jnp.float32).astype(jnp.bfloat16)
    eps = jax.random.normal(k_eps, (B, b_lat), jnp.float32)   # randn_like(std) equivalent
    # TODO(synk): eps is supplied externally; torch.randn_like inside forward has no
    # in-kernel equivalent here (could use pltpu.prng_* if RNG-in-kernel is desired).
    raw_params = init_params(k_p, N, hidden, b_lat)
    params = prepare_params(raw_params, hidden, H_PAD)

    outs = shallow_vae_forward(x, eps, params, tb=TB)
    outs = jax.block_until_ready(outs)

    refs = _reference(x, eps, params, b_lat)
    for name, o, r in zip(("z", "recon", "mu", "logvar"), outs, refs):
        assert o.shape == r.shape and o.dtype == r.dtype, f"shape/dtype mismatch in {name}"
        assert jnp.allclose(o.astype(jnp.float32), r.astype(jnp.float32),
                            rtol=2e-2, atol=2e-2), f"mismatch vs reference in {name}"

    print("KERNEL_OK")
</pallas_src>

<mosaic_0001>
module attributes {stable_mosaic.version = 11 : i64} {
  func.func @_vae_kernel(%arg0: i32, %arg1: memref<256x256xbf16, #tpu.memory_space<vmem>>, %arg2: memref<256x16xf32, #tpu.memory_space<vmem>>, %arg3: memref<256x256xbf16, #tpu.memory_space<vmem>>, %arg4: memref<1x256xf32, #tpu.memory_space<vmem>>, %arg5: memref<256x32xbf16, #tpu.memory_space<vmem>>, %arg6: memref<1x32xf32, #tpu.memory_space<vmem>>, %arg7: memref<16x256xbf16, #tpu.memory_space<vmem>>, %arg8: memref<1x256xf32, #tpu.memory_space<vmem>>, %arg9: memref<256x256xbf16, #tpu.memory_space<vmem>>, %arg10: memref<1x256xf32, #tpu.memory_space<vmem>>, %arg11: memref<256x256xbf16, #tpu.memory_space<vmem>>, %arg12: memref<256x128xf32, #tpu.memory_space<vmem>>) attributes {dimension_semantics = [#tpu.dimension_semantics<parallel>], iteration_bounds = array<i64: 2>, scalar_prefetch = 0 : i64, scratch_operands = 0 : i64, tpu.core_type = #tpu.core_type<tc>, window_params = [{transform_indices = @transform_0, window_bounds = array<i64: 256, 256>}, {transform_indices = @transform_1, window_bounds = array<i64: 256, 16>}, {pipeline_mode = #tpu.pipeline_mode<synchronous>, transform_indices = @transform_2, window_bounds = array<i64: 256, 256>}, {pipeline_mode = #tpu.pipeline_mode<synchronous>, transform_indices = @transform_3, window_bounds = array<i64: 1, 256>}, {pipeline_mode = #tpu.pipeline_mode<synchronous>, transform_indices = @transform_4, window_bounds = array<i64: 256, 32>}, {pipeline_mode = #tpu.pipeline_mode<synchronous>, transform_indices = @transform_5, window_bounds = array<i64: 1, 32>}, {pipeline_mode = #tpu.pipeline_mode<synchronous>, transform_indices = @transform_6, window_bounds = array<i64: 16, 256>}, {pipeline_mode = #tpu.pipeline_mode<synchronous>, transform_indices = @transform_7, window_bounds = array<i64: 1, 256>}, {pipeline_mode = #tpu.pipeline_mode<synchronous>, transform_indices = @transform_8, window_bounds = array<i64: 256, 256>}, {pipeline_mode = #tpu.pipeline_mode<synchronous>, transform_indices = @transform_9, window_bounds = array<i64: 1, 256>}, {transform_indices = @transform_10, window_bounds = array<i64: 256, 256>}, {transform_indices = @transform_11, window_bounds = array<i64: 256, 128>}]} {
    %c0 = arith.constant 0 : index
    %c0_0 = arith.constant 0 : index
    %0 = vector.load %arg1[%c0, %c0_0] : memref<256x256xbf16, #tpu.memory_space<vmem>>, vector<256x256xbf16>
    %c0_1 = arith.constant 0 : index
    %c0_2 = arith.constant 0 : index
    %1 = vector.load %arg3[%c0_1, %c0_2] : memref<256x256xbf16, #tpu.memory_space<vmem>>, vector<256x256xbf16>
    %cst = arith.constant dense<0.000000e+00> : vector<256x256xf32>
    %2 = tpu.matmul %0, %1, %cst {dimension_numbers = #tpu.dot_dimension_numbers<[1], [0], [0], [1], [0, 0, 1, 1], [], []>} : vector<256x256xbf16>, vector<256x256xbf16>, vector<256x256xf32> -> vector<256x256xf32>
    %c0_3 = arith.constant 0 : index
    %c0_4 = arith.constant 0 : index
    %3 = vector.load %arg4[%c0_3, %c0_4] : memref<1x256xf32, #tpu.memory_space<vmem>>, vector<1x256xf32>
    %4 = vector.broadcast %3 : vector<1x256xf32> to vector<256x256xf32>
    %5 = arith.addf %2, %4 : vector<256x256xf32>
    %cst_5 = arith.constant 0.000000e+00 : f32
    %6 = vector.broadcast %cst_5 : f32 to vector<256x256xf32>
    %7 = arith.maximumf %5, %6 : vector<256x256xf32>
    %8 = arith.truncf %7 : vector<256x256xf32> to vector<256x256xbf16>
    %c0_6 = arith.constant 0 : index
    %c0_7 = arith.constant 0 : index
    %9 = vector.load %arg5[%c0_6, %c0_7] : memref<256x32xbf16, #tpu.memory_space<vmem>>, vector<256x32xbf16>
    %cst_8 = arith.constant dense<0.000000e+00> : vector<256x32xf32>
    %10 = tpu.matmul %8, %9, %cst_8 {dimension_numbers = #tpu.dot_dimension_numbers<[1], [0], [0], [1], [0, 0, 1, 1], [], []>} : vector<256x256xbf16>, vector<256x32xbf16>, vector<256x32xf32> -> vector<256x32xf32>
    %c0_9 = arith.constant 0 : index
    %c0_10 = arith.constant 0 : index
    %11 = vector.load %arg6[%c0_9, %c0_10] : memref<1x32xf32, #tpu.memory_space<vmem>>, vector<1x32xf32>
    %12 = vector.broadcast %11 : vector<1x32xf32> to vector<256x32xf32>
    %13 = arith.addf %10, %12 : vector<256x32xf32>
    %14 = vector.extract_strided_slice %13 {offsets = [0, 0], sizes = [256, 16], strides = [1, 1]} : vector<256x32xf32> to vector<256x16xf32>
    %15 = vector.extract_strided_slice %13 {offsets = [0, 16], sizes = [256, 16], strides = [1, 1]} : vector<256x32xf32> to vector<256x16xf32>
    %cst_11 = arith.constant 5.000000e-01 : f32
    %16 = vector.broadcast %cst_11 : f32 to vector<256x16xf32>
    %17 = arith.mulf %16, %15 : vector<256x16xf32>
    %18 = math.exp %17 : vector<256x16xf32>
    %c0_12 = arith.constant 0 : index
    %c0_13 = arith.constant 0 : index
    %19 = vector.load %arg2[%c0_12, %c0_13] : memref<256x16xf32, #tpu.memory_space<vmem>>, vector<256x16xf32>
    %20 = arith.mulf %19, %18 : vector<256x16xf32>
    %21 = arith.addf %20, %14 : vector<256x16xf32>
    %22 = arith.truncf %21 : vector<256x16xf32> to vector<256x16xbf16>
    %c0_14 = arith.constant 0 : index
    %c0_15 = arith.constant 0 : index
    %23 = vector.load %arg7[%c0_14, %c0_15] : memref<16x256xbf16, #tpu.memory_space<vmem>>, vector<16x256xbf16>
    %cst_16 = arith.constant dense<0.000000e+00> : vector<256x256xf32>
    %24 = tpu.matmul %22, %23, %cst_16 {dimension_numbers = #tpu.dot_dimension_numbers<[1], [0], [0], [1], [0, 0, 1, 1], [], []>} : vector<256x16xbf16>, vector<16x256xbf16>, vector<256x256xf32> -> vector<256x256xf32>
    %c0_17 = arith.constant 0 : index
    %c0_18 = arith.constant 0 : index
    %25 = vector.load %arg8[%c0_17, %c0_18] : memref<1x256xf32, #tpu.memory_space<vmem>>, vector<1x256xf32>
    %26 = vector.broadcast %25 : vector<1x256xf32> to vector<256x256xf32>
    %27 = arith.addf %24, %26 : vector<256x256xf32>
    %cst_19 = arith.constant 0.000000e+00 : f32
    %28 = vector.broadcast %cst_19 : f32 to vector<256x256xf32>
    %29 = arith.maximumf %27, %28 : vector<256x256xf32>
    %30 = arith.truncf %29 : vector<256x256xf32> to vector<256x256xbf16>
    %c0_20 = arith.constant 0 : index
    %c0_21 = arith.constant 0 : index
    %31 = vector.load %arg9[%c0_20, %c0_21] : memref<256x256xbf16, #tpu.memory_space<vmem>>, vector<256x256xbf16>
    %cst_22 = arith.constant dense<0.000000e+00> : vector<256x256xf32>
    %32 = tpu.matmul %30, %31, %cst_22 {dimension_numbers = #tpu.dot_dimension_numbers<[1], [0], [0], [1], [0, 0, 1, 1], [], []>} : vector<256x256xbf16>, vector<256x256xbf16>, vector<256x256xf32> -> vector<256x256xf32>
    %c0_23 = arith.constant 0 : index
    %c0_24 = arith.constant 0 : index
    %33 = vector.load %arg10[%c0_23, %c0_24] : memref<1x256xf32, #tpu.memory_space<vmem>>, vector<1x256xf32>
    %34 = vector.broadcast %33 : vector<1x256xf32> to vector<256x256xf32>
    %35 = arith.addf %32, %34 : vector<256x256xf32>
    %36 = arith.truncf %35 : vector<256x256xf32> to vector<256x256xbf16>
    %c0_25 = arith.constant 0 : index
    %c0_26 = arith.constant 0 : index
    %37 = vector.load %arg11[%c0_25, %c0_26] : memref<256x256xbf16, #tpu.memory_space<vmem>>, vector<256x256xbf16>
    tpu.vector_store %arg11[%c0_25, %c0_26], %36 {strides = array<i32>} : memref<256x256xbf16, #tpu.memory_space<vmem>>, vector<256x256xbf16>,
    %cst_27 = arith.constant 0.000000e+00 : f32
    %38 = vector.broadcast %cst_27 : f32 to vector<256x80xf32>
    %39 = tpu.concatenate %21, %13, %38 in 1 : vector<256x16xf32>, vector<256x32xf32>, vector<256x80xf32> -> vector<256x128xf32>
    %c0_28 = arith.constant 0 : index
    %c0_29 = arith.constant 0 : index
    %40 = vector.load %arg12[%c0_28, %c0_29] : memref<256x128xf32, #tpu.memory_space<vmem>>, vector<256x128xf32>
    tpu.vector_store %arg12[%c0_28, %c0_29], %39 {strides = array<i32>} : memref<256x128xf32, #tpu.memory_space<vmem>>, vector<256x128xf32>,
    return
  }
  func.func @transform_0(%arg0: i32) -> (i32, i32) {
    %c0_i32 = arith.constant 0 : i32
    %c0_i32_0 = arith.constant 0 : i32
    return %arg0, %c0_i32 : i32, i32
  }
  func.func @transform_1(%arg0: i32) -> (i32, i32) {
    %c0_i32 = arith.constant 0 : i32
    %c0_i32_0 = arith.constant 0 : i32
    return %arg0, %c0_i32 : i32, i32
  }
  func.func @transform_2(%arg0: i32) -> (i32, i32) {
    %c0_i32 = arith.constant 0 : i32
    %c0_i32_0 = arith.constant 0 : i32
    %c0_i32_1 = arith.constant 0 : i32
    return %c0_i32, %c0_i32_0 : i32, i32
  }
  func.func @transform_3(%arg0: i32) -> (i32, i32) {
    %c0_i32 = arith.constant 0 : i32
    %c0_i32_0 = arith.constant 0 : i32
    %c0_i32_1 = arith.constant 0 : i32
    return %c0_i32, %c0_i32_0 : i32, i32
  }
  func.func @transform_4(%arg0: i32) -> (i32, i32) {
    %c0_i32 = arith.constant 0 : i32
    %c0_i32_0 = arith.constant 0 : i32
    %c0_i32_1 = arith.constant 0 : i32
    return %c0_i32, %c0_i32_0 : i32, i32
  }
  func.func @transform_5(%arg0: i32) -> (i32, i32) {
    %c0_i32 = arith.constant 0 : i32
    %c0_i32_0 = arith.constant 0 : i32
    %c0_i32_1 = arith.constant 0 : i32
    return %c0_i32, %c0_i32_0 : i32, i32
  }
  func.func @transform_6(%arg0: i32) -> (i32, i32) {
    %c0_i32 = arith.constant 0 : i32
    %c0_i32_0 = arith.constant 0 : i32
    %c0_i32_1 = arith.constant 0 : i32
    return %c0_i32, %c0_i32_0 : i32, i32
  }
  func.func @transform_7(%arg0: i32) -> (i32, i32) {
    %c0_i32 = arith.constant 0 : i32
    %c0_i32_0 = arith.constant 0 : i32
    %c0_i32_1 = arith.constant 0 : i32
    return %c0_i32, %c0_i32_0 : i32, i32
  }
  func.func @transform_8(%arg0: i32) -> (i32, i32) {
    %c0_i32 = arith.constant 0 : i32
    %c0_i32_0 = arith.constant 0 : i32
    %c0_i32_1 = arith.constant 0 : i32
    return %c0_i32, %c0_i32_0 : i32, i32
  }
  func.func @transform_9(%arg0: i32) -> (i32, i32) {
    %c0_i32 = arith.constant 0 : i32
    %c0_i32_0 = arith.constant 0 : i32
    %c0_i32_1 = arith.constant 0 : i32
    return %c0_i32, %c0_i32_0 : i32, i32
  }
  func.func @transform_10(%arg0: i32) -> (i32, i32) {
    %c0_i32 = arith.constant 0 : i32
    %c0_i32_0 = arith.constant 0 : i32
    return %arg0, %c0_i32 : i32, i32
  }
  func.func @transform_11(%arg0: i32) -> (i32, i32) {
    %c0_i32 = arith.constant 0 : i32
    %c0_i32_0 = arith.constant 0 : i32
    return %arg0, %c0_i32 : i32, i32
  }
}

</mosaic_0001>

<llo_original>
// kernel: tpu_custom_call.1
$region0: #{tpu_custom_call.1}
  #allocation0 [shape = 'u32[]', space=smem, size = 0x4, offset = 0x4, fixed_abs, tag = 'smem constant byte address 0x4 - core index']
  #allocation1 [shape = 'u32[144,128]{1,0:T(1,128)}', space=vmem, size = 0x12000, scoped, tag = 'internal scratch']
  %s0 = inlined_call_operand.hbm [shape: bf16[512,256], index: 0, kind: input, shape index: {}]
  %s1 = inlined_call_operand.hbm [shape: f32[512,16], index: 1, kind: input, shape index: {}]
  %s2 = inlined_call_operand.hbm [shape: bf16[256,256], index: 2, kind: input, shape index: {}]
  %s3 = inlined_call_operand.hbm [shape: f32[1,256], index: 3, kind: input, shape index: {}]
  %s4 = inlined_call_operand.hbm [shape: bf16[256,32], index: 4, kind: input, shape index: {}]
  %s5 = inlined_call_operand.hbm [shape: f32[1,32], index: 5, kind: input, shape index: {}]
  %s6 = inlined_call_operand.hbm [shape: bf16[16,256], index: 6, kind: input, shape index: {}]
  %s7 = inlined_call_operand.hbm [shape: f32[1,256], index: 7, kind: input, shape index: {}]
  %s8 = inlined_call_operand.hbm [shape: bf16[256,256], index: 8, kind: input, shape index: {}]
  %s9 = inlined_call_operand.hbm [shape: f32[1,256], index: 9, kind: input, shape index: {}]
  %s10 = inlined_call_operand.hbm [shape: bf16[512,256], index: 10, kind: output, shape index: {0}]
  %s11 = inlined_call_operand.hbm [shape: f32[512,128], index: 11, kind: output, shape index: {1}]
  %12 = xla_tuple %s10, %s11
  %s13 = sld [smem:[#allocation0]]
  $region121: #{tpu_custom_call.1} parent=0
    _
  %s15 = ssub.s32 1, %s13
  %s16 = scalar_select 0, %s15, %s13
  $region1: #{tpu_custom_call.1} parent=0
    #allocation2 [shape = 'u8[262144]{0}', space=vmem, size = 0x40000, scoped, tag = 'input window, operand 0']
    #allocation3 [shape = 's32[2]{0}', space=sflag, size = 0x8, scoped, tag = 'scoped memory for tpu_custom_call.1']
    #allocation4 [shape = 's32[2]{0}', space=sflag, size = 0x8, scoped, tag = 'scoped memory for tpu_custom_call.1']
    #allocation5 [shape = 'u8[262144]{0}', space=vmem, size = 0x40000, scoped, tag = 'input window, operand 1']
    #allocation6 [shape = 's32[2]{0}', space=sflag, size = 0x8, scoped, tag = 'scoped memory for tpu_custom_call.1']
    #allocation7 [shape = 'u8[131072]{0}', space=vmem, size = 0x20000, scoped, tag = 'input window, operand 2, single buffered']
    #allocation8 [shape = 'u8[1024]{0}', space=vmem, size = 0x400, scoped, tag = 'input window, operand 3, single buffered']
    #allocation9 [shape = 's32[1]{0}', space=sflag, size = 0x4, scoped, tag = 'scoped memory for tpu_custom_call.1']
    #allocation10 [shape = 'u8[65536]{0}', space=vmem, size = 0x10000, scoped, tag = 'input window, operand 4, single buffered']
    #allocation11 [shape = 'u8[512]{0}', space=vmem, size = 0x400, scoped, tag = 'input window, operand 5, single buffered']
    #allocation12 [shape = 's32[1]{0}', space=sflag, size = 0x4, scoped, tag = 'scoped memory for tpu_custom_call.1']
    #allocation13 [shape = 'u8[8192]{0}', space=vmem, size = 0x2000, scoped, tag = 'input window, operand 6, single buffered']
    #allocation14 [shape = 'u8[1024]{0}', space=vmem, size = 0x400, scoped, tag = 'input window, operand 7, single buffered']
    #allocation15 [shape = 's32[1]{0}', space=sflag, size = 0x4, scoped, tag = 'scoped memory for tpu_custom_call.1']
    #allocation16 [shape = 'u8[131072]{0}', space=vmem, size = 0x20000, scoped, tag = 'input window, operand 8, single buffered']
    #allocation17 [shape = 'u8[1024]{0}', space=vmem, size = 0x400, scoped, tag = 'input window, operand 9, single buffered']
    #allocation18 [shape = 's32[1]{0}', space=sflag, size = 0x4, scoped, tag = 'scoped memory for tpu_custom_call.1']
    #allocation19 [shape = 'u8[262144]{0}', space=vmem, size = 0x40000, scoped, tag = 'output window, operand 0']
    #allocation20 [shape = 'u8[262144]{0}', space=vmem, size = 0x40000, scoped, tag = 'output window, operand 1']
    #allocation21 [shape = 's32[2]{0}', space=sflag, size = 0x8, scoped, tag = 'scoped memory for tpu_custom_call.1']
    %17 = vsyncpa [#allocation3], 0
    %s18 = scalar_lea.sflag [#allocation3], 1
    %19 = vsyncpa %s18, 0
    %20 = vsyncpa [#allocation6], 0
    %s21 = scalar_lea.sflag [#allocation6], 1
    %22 = vsyncpa %s21, 0
    %23 = vsyncpa [#allocation9], 0
    %24 = vsyncpa [#allocation12], 0
    %25 = vsyncpa [#allocation15], 0
    %26 = vsyncpa [#allocation18], 0
    %27 = vsyncpa [#allocation4], 0
    %s28 = scalar_lea.sflag [#allocation4], 1
    %29 = vsyncpa %s28, 0
    %30 = vsyncpa [#allocation21], 0
    %s31 = scalar_lea.sflag [#allocation21], 1
    %32 = vsyncpa %s31, 0
    loop: start=0, step=1, limit=4
    $region2: #{tpu_custom_call.1} parent=1 // loop_pre_header
      _
    $region3: #{tpu_custom_call.1} parent=1 // loop_header
      %s34 = sphi 0, %s38
      %p35 = scmp.ge.s32.totalorder %s34, 4
      %s44 = sphi 0, %s46
      %s47 = sphi 0, %s44
      %s48 = sphi 0, %s47
      %s64 = sphi 0, %s48
      %s70 = sphi 0, %s72
      %s73 = sphi 0, %s70
      %s74 = sphi 0, %s73
      %s90 = sphi 0, %s74
      %s94 = sphi 0, %s94
      %s96 = sphi 0, %s94
      %s97 = sphi 0, %s96
      %s111 = sphi 0, %s97
      %s115 = sphi 0, %s115
      %s117 = sphi 0, %s115
      %s118 = sphi 0, %s117
      %s132 = sphi 0, %s118
      %s136 = sphi 0, %s136
      %s138 = sphi 0, %s136
      %s139 = sphi 0, %s138
      %s153 = sphi 0, %s139
      %s157 = sphi 0, %s157
      %s159 = sphi 0, %s157
      %s160 = sphi 0, %s159
      %s174 = sphi 0, %s160
      %s178 = sphi 0, %s178
      %s180 = sphi 0, %s178
      %s181 = sphi 0, %s180
      %s195 = sphi 0, %s181
      %s199 = sphi 0, %s199
      %s201 = sphi 0, %s199
      %s202 = sphi 0, %s201
      %s216 = sphi 0, %s202
      %s220 = sphi 0, %s220
      %s222 = sphi 0, %s220
      %s223 = sphi 0, %s222
      %s237 = sphi 0, %s223
      %s241 = sphi 0, %s241
      %s243 = sphi 0, %s241
      %s244 = sphi 0, %s243
      %s258 = sphi 0, %s244
      %s264 = sphi 0, %s266
      %s267 = sphi 0, %s264
      %s268 = sphi 0, %s267
      %s284 = sphi 0, %s268
      %s290 = sphi 0, %s292
      %s293 = sphi 0, %s290
      %s294 = sphi 0, %s293
      %s310 = sphi 0, %s294
    $region4: #{tpu_custom_call.1} parent=1 // loop_header_branch
      %37 = sbr.rel (%p35) target = $region8
    $region5: #{tpu_custom_call.1} parent=1 // loop_body
      %s39 = ssub.s32 %s34, 1
      %s40 = ssub.s32 %s34, 2
      %s41 = sadd.s32 %s34, 1
      %s42 = ssub.s32 %s34, %s41
      %p43 = scmp.eq.s32.totalorder %s42, 0
      %s45 = sadd.s32 %s44, 1
      %s46 = scalar_select %p43, %s44, %s45
      %p49 = pneg %p43
      %p50 = scmp.eq.s32.totalorder %s34, 1
      %p51 = por %p49, %p50
      %p52 = scmp.ne.s32.totalorder %s44, %s47
      %p53 = scmp.eq.s32.totalorder %s34, 0
      %p54 = por %p52, %p53
      %p55 = scmp.ne.s32.totalorder %s44, %s47
      %p56 = scmp.eq.s32.totalorder %s39, 1
      %p57 = por %p55, %p56
      %p58 = scmp.ne.s32.totalorder %s47, %s48
      %p59 = scmp.eq.s32.totalorder %s39, 0
      %p60 = por %p58, %p59
      %p61 = scmp.ne.s32.totalorder %s47, %s48
      %p62 = scmp.eq.s32.totalorder %s40, 1
      %p63 = por %p61, %p62
      %p65 = scmp.ne.s32.totalorder %s48, %s64
      %p66 = scmp.eq.s32.totalorder %s40, 0
      %p67 = por %p65, %p66
      %s68 = ssub.s32 %s34, %s41
      %p69 = scmp.eq.s32.totalorder %s68, 0
      %s71 = sadd.s32 %s70, 1
      %s72 = scalar_select %p69, %s70, %s71
      %p75 = pneg %p69
      %p76 = scmp.eq.s32.totalorder %s34, 1
      %p77 = por %p75, %p76
      %p78 = scmp.ne.s32.totalorder %s70, %s73
      %p79 = scmp.eq.s32.totalorder %s34, 0
      %p80 = por %p78, %p79
      %p81 = scmp.ne.s32.totalorder %s70, %s73
      %p82 = scmp.eq.s32.totalorder %s39, 1
      %p83 = por %p81, %p82
      %p84 = scmp.ne.s32.totalorder %s73, %s74
      %p85 = scmp.eq.s32.totalorder %s39, 0
      %p86 = por %p84, %p85
      %p87 = scmp.ne.s32.totalorder %s73, %s74
      %p88 = scmp.eq.s32.totalorder %s40, 1
      %p89 = por %p87, %p88
      %p91 = scmp.ne.s32.totalorder %s74, %s90
      %p92 = scmp.eq.s32.totalorder %s40, 0
      %p93 = por %p91, %p92
      %s95 = sadd.s32 %s94, 1
      %p98 = scmp.eq.s32.totalorder %s34, 1
      %p99 = scmp.ne.s32.totalorder %s94, %s96
      %p100 = scmp.eq.s32.totalorder %s34, 0
      %p101 = por %p99, %p100
      %p102 = scmp.ne.s32.totalorder %s94, %s96
      %p103 = scmp.eq.s32.totalorder %s39, 1
      %p104 = por %p102, %p103
      %p105 = scmp.ne.s32.totalorder %s96, %s97
      %p106 = scmp.eq.s32.totalorder %s39, 0
      %p107 = por %p105, %p106
      %p108 = scmp.ne.s32.totalorder %s96, %s97
      %p109 = scmp.eq.s32.totalorder %s40, 1
      %p110 = por %p108, %p109
      %p112 = scmp.ne.s32.totalorder %s97, %s111
      %p113 = scmp.eq.s32.totalorder %s40, 0
      %p114 = por %p112, %p113
      %s116 = sadd.s32 %s115, 1
      %p119 = scmp.eq.s32.totalorder %s34, 1
      %p120 = scmp.ne.s32.totalorder %s115, %s117
      %p121 = scmp.eq.s32.totalorder %s34, 0
      %p122 = por %p120, %p121
      %p123 = scmp.ne.s32.totalorder %s115, %s117
      %p124 = scmp.eq.s32.totalorder %s39, 1
      %p125 = por %p123, %p124
      %p126 = scmp.ne.s32.totalorder %s117, %s118
      %p127 = scmp.eq.s32.totalorder %s39, 0
      %p128 = por %p126, %p127
      %p129 = scmp.ne.s32.totalorder %s117, %s118
      %p130 = scmp.eq.s32.totalorder %s40, 1
      %p131 = por %p129, %p130
      %p133 = scmp.ne.s32.totalorder %s118, %s132
      %p134 = scmp.eq.s32.totalorder %s40, 0
      %p135 = por %p133, %p134
      %s137 = sadd.s32 %s136, 1
      %p140 = scmp.eq.s32.totalorder %s34, 1
      %p141 = scmp.ne.s32.totalorder %s136, %s138
      %p142 = scmp.eq.s32.totalorder %s34, 0
      %p143 = por %p141, %p142
      %p144 = scmp.ne.s32.totalorder %s136, %s138
      %p145 = scmp.eq.s32.totalorder %s39, 1
      %p146 = por %p144, %p145
      %p147 = scmp.ne.s32.totalorder %s138, %s139
      %p148 = scmp.eq.s32.totalorder %s39, 0
      %p149 = por %p147, %p148
      %p150 = scmp.ne.s32.totalorder %s138, %s139
      %p151 = scmp.eq.s32.totalorder %s40, 1
      %p152 = por %p150, %p151
      %p154 = scmp.ne.s32.totalorder %s139, %s153
      %p155 = scmp.eq.s32.totalorder %s40, 0
      %p156 = por %p154, %p155
      %s158 = sadd.s32 %s157, 1
      %p161 = scmp.eq.s32.totalorder %s34, 1
      %p162 = scmp.ne.s32.totalorder %s157, %s159
      %p163 = scmp.eq.s32.totalorder %s34, 0
      %p164 = por %p162, %p163
      %p165 = scmp.ne.s32.totalorder %s157, %s159
      %p166 = scmp.eq.s32.totalorder %s39, 1
      %p167 = por %p165, %p166
      %p168 = scmp.ne.s32.totalorder %s159, %s160
      %p169 = scmp.eq.s32.totalorder %s39, 0
      %p170 = por %p168, %p169
      %p171 = scmp.ne.s32.totalorder %s159, %s160
      %p172 = scmp.eq.s32.totalorder %s40, 1
      %p173 = por %p171, %p172
      %p175 = scmp.ne.s32.totalorder %s160, %s174
      %p176 = scmp.eq.s32.totalorder %s40, 0
      %p177 = por %p175, %p176
      %s179 = sadd.s32 %s178, 1
      %p182 = scmp.eq.s32.totalorder %s34, 1
      %p183 = scmp.ne.s32.totalorder %s178, %s180
      %p184 = scmp.eq.s32.totalorder %s34, 0
      %p185 = por %p183, %p184
      %p186 = scmp.ne.s32.totalorder %s178, %s180
      %p187 = scmp.eq.s32.totalorder %s39, 1
      %p188 = por %p186, %p187
      %p189 = scmp.ne.s32.totalorder %s180, %s181
      %p190 = scmp.eq.s32.totalorder %s39, 0
      %p191 = por %p189, %p190
      %p192 = scmp.ne.s32.totalorder %s180, %s181
      %p193 = scmp.eq.s32.totalorder %s40, 1
      %p194 = por %p192, %p193
      %p196 = scmp.ne.s32.totalorder %s181, %s195
      %p197 = scmp.eq.s32.totalorder %s40, 0
      %p198 = por %p196, %p197
      %s200 = sadd.s32 %s199, 1
      %p203 = scmp.eq.s32.totalorder %s34, 1
      %p204 = scmp.ne.s32.totalorder %s199, %s201
      %p205 = scmp.eq.s32.totalorder %s34, 0
      %p206 = por %p204, %p205
      %p207 = scmp.ne.s32.totalorder %s199, %s201
      %p208 = scmp.eq.s32.totalorder %s39, 1
      %p209 = por %p207, %p208
      %p210 = scmp.ne.s32.totalorder %s201, %s202
      %p211 = scmp.eq.s32.totalorder %s39, 0
      %p212 = por %p210, %p211
      %p213 = scmp.ne.s32.totalorder %s201, %s202
      %p214 = scmp.eq.s32.totalorder %s40, 1
      %p215 = por %p213, %p214
      %p217 = scmp.ne.s32.totalorder %s202, %s216
      %p218 = scmp.eq.s32.totalorder %s40, 0
      %p219 = por %p217, %p218
      %s221 = sadd.s32 %s220, 1
      %p224 = scmp.eq.s32.totalorder %s34, 1
      %p225 = scmp.ne.s32.totalorder %s220, %s222
      %p226 = scmp.eq.s32.totalorder %s34, 0
      %p227 = por %p225, %p226
      %p228 = scmp.ne.s32.totalorder %s220, %s222
      %p229 = scmp.eq.s32.totalorder %s39, 1
      %p230 = por %p228, %p229
      %p231 = scmp.ne.s32.totalorder %s222, %s223
      %p232 = scmp.eq.s32.totalorder %s39, 0
      %p233 = por %p231, %p232
      %p234 = scmp.ne.s32.totalorder %s222, %s223
      %p235 = scmp.eq.s32.totalorder %s40, 1
      %p236 = por %p234, %p235
      %p238 = scmp.ne.s32.totalorder %s223, %s237
      %p239 = scmp.eq.s32.totalorder %s40, 0
      %p240 = por %p238, %p239
      %s242 = sadd.s32 %s241, 1
      %p245 = scmp.eq.s32.totalorder %s34, 1
      %p246 = scmp.ne.s32.totalorder %s241, %s243
      %p247 = scmp.eq.s32.totalorder %s34, 0
      %p248 = por %p246, %p247
      %p249 = scmp.ne.s32.totalorder %s241, %s243
      %p250 = scmp.eq.s32.totalorder %s39, 1
      %p251 = por %p249, %p250
      %p252 = scmp.ne.s32.totalorder %s243, %s244
      %p253 = scmp.eq.s32.totalorder %s39, 0
      %p254 = por %p252, %p253
      %p255 = scmp.ne.s32.totalorder %s243, %s244
      %p256 = scmp.eq.s32.totalorder %s40, 1
      %p257 = por %p255, %p256
      %p259 = scmp.ne.s32.totalorder %s244, %s258
      %p260 = scmp.eq.s32.totalorder %s40, 0
      %p261 = por %p259, %p260
      %s262 = ssub.s32 %s34, %s41
      %p263 = scmp.eq.s32.totalorder %s262, 0
      %s265 = sadd.s32 %s264, 1
      %s266 = scalar_select %p263, %s264, %s265
      %p269 = pneg %p263
      %p270 = scmp.eq.s32.totalorder %s34, 1
      %p271 = por %p269, %p270
      %p272 = scmp.ne.s32.totalorder %s264, %s267
      %p273 = scmp.eq.s32.totalorder %s34, 0
      %p274 = por %p272, %p273
      %p275 = scmp.ne.s32.totalorder %s264, %s267
      %p276 = scmp.eq.s32.totalorder %s39, 1
      %p277 = por %p275, %p276
      %p278 = scmp.ne.s32.totalorder %s267, %s268
      %p279 = scmp.eq.s32.totalorder %s39, 0
      %p280 = por %p278, %p279
      %p281 = scmp.ne.s32.totalorder %s267, %s268
      %p282 = scmp.eq.s32.totalorder %s40, 1
      %p283 = por %p281, %p282
      %p285 = scmp.ne.s32.totalorder %s268, %s284
      %p286 = scmp.eq.s32.totalorder %s40, 0
      %p287 = por %p285, %p286
      %s288 = ssub.s32 %s34, %s41
      %p289 = scmp.eq.s32.totalorder %s288, 0
      %s291 = sadd.s32 %s290, 1
      %s292 = scalar_select %p289, %s290, %s291
      %p295 = pneg %p289
      %p296 = scmp.eq.s32.totalorder %s34, 1
      %p297 = por %p295, %p296
      %p298 = scmp.ne.s32.totalorder %s290, %s293
      %p299 = scmp.eq.s32.totalorder %s34, 0
      %p300 = por %p298, %p299
      %p301 = scmp.ne.s32.totalorder %s290, %s293
      %p302 = scmp.eq.s32.totalorder %s39, 1
      %p303 = por %p301, %p302
      %p304 = scmp.ne.s32.totalorder %s293, %s294
      %p305 = scmp.eq.s32.totalorder %s39, 0
      %p306 = por %p304, %p305
      %p307 = scmp.ne.s32.totalorder %s293, %s294
      %p308 = scmp.eq.s32.totalorder %s40, 1
      %p309 = por %p307, %p308
      %p311 = scmp.ne.s32.totalorder %s294, %s310
      %p312 = scmp.eq.s32.totalorder %s40, 0
      %p313 = por %p311, %p312
      %p314 = scmp.le.s32.totalorder 1, %s34
      %p315 = scmp.lt.s32.totalorder %s34, 3
      %p316 = pnand %p314, %p315
      %p317 = pneg %p316
      // Predicated region
      $region9: #{tpu_custom_call.1} parent=5 // pred_check
        _
      $region10: #{tpu_custom_call.1} parent=5 // pred_check_branch
        %319 = sbr.rel (%p316) target = $region12
      $region11: #{tpu_custom_call.1} parent=5 // pred_region
        %s320 = ssub.s32 %s34, 1
        // Predicated region
        $region13: #{tpu_custom_call.1} parent=11 // pred_check
          %p321 = pneg %p107
        $region14: #{tpu_custom_call.1} parent=11 // pred_check_branch
          %323 = sbr.rel (%p321) target = $region16
        $region15: #{tpu_custom_call.1} parent=11 // pred_region
          %s325 = ssub.s32 4096, 4096
          %326 = vsyncadd [#allocation6], %s325
          %s327 = sshll.u32 [#allocation7], 4
          %s328 = int_to_ptr.vmem [resolvable:$true] %s327
          %333 = dma.hbm_to_vmem [thread:$0]  %s2, 4096, %s328, [#allocation6], 128, 128, 8
        $region16: #{tpu_custom_call.1} parent=11 // pred_fallthru
          _
        // Predicated region
        $region17: #{tpu_custom_call.1} parent=11 // pred_check
          %p334 = pneg %p128
        $region18: #{tpu_custom_call.1} parent=11 // pred_check_branch
          %336 = sbr.rel (%p334) target = $region20
        $region19: #{tpu_custom_call.1} parent=11 // pred_region
          %s338 = ssub.s32 32, 32
          %339 = vsyncadd [#allocation9], %s338
          %s341 = sshll.u32 [#allocation8], 4
          %s342 = int_to_ptr.vmem [resolvable:$true] %s341
          %344 = dma.hbm_to_vmem [thread:$0]  %s3, 32, %s342, [#allocation9]
        $region20: #{tpu_custom_call.1} parent=11 // pred_fallthru
          _
        // Predicated region
        $region21: #{tpu_custom_call.1} parent=11 // pred_check
          %p345 = pneg %p149
        $region22: #{tpu_custom_call.1} parent=11 // pred_check_branch
          %347 = sbr.rel (%p345) target = $region24
        $region23: #{tpu_custom_call.1} parent=11 // pred_region
          %s349 = ssub.s32 2048, 2048
          %350 = vsyncadd [#allocation9], %s349
          %s351 = sshll.u32 [#allocation10], 4
          %s352 = int_to_ptr.vmem [resolvable:$true] %s351
          %357 = dma.hbm_to_vmem [thread:$0]  %s4, 2048, %s352, [#allocation9], 64, 64, 4
        $region24: #{tpu_custom_call.1} parent=11 // pred_fallthru
          _
        // Predicated region
        $region25: #{tpu_custom_call.1} parent=11 // pred_check
          %p358 = pneg %p170
        $region26: #{tpu_custom_call.1} parent=11 // pred_check_branch
          %360 = sbr.rel (%p358) target = $region28
        $region27: #{tpu_custom_call.1} parent=11 // pred_region
          %s362 = ssub.s32 16, 16
          %363 = vsyncadd [#allocation12], %s362
          %s365 = sshll.u32 [#allocation11], 4
          %s366 = int_to_ptr.vmem [resolvable:$true] %s365
          %368 = dma.hbm_to_vmem [thread:$0]  %s5, 16, %s366, [#allocation12]
        $region28: #{tpu_custom_call.1} parent=11 // pred_fallthru
          _
        // Predicated region
        $region29: #{tpu_custom_call.1} parent=11 // pred_check
          %p369 = pneg %p191
        $region30: #{tpu_custom_call.1} parent=11 // pred_check_branch
          %371 = sbr.rel (%p369) target = $region32
        $region31: #{tpu_custom_call.1} parent=11 // pred_region
          %s373 = ssub.s32 256, 256
          %374 = vsyncadd [#allocation12], %s373
          %s375 = sshll.u32 [#allocation13], 4
          %s376 = int_to_ptr.vmem [resolvable:$true] %s375
          %381 = dma.hbm_to_vmem [thread:$0]  %s6, 256, %s376, [#allocation12], 128, 128, 8
        $region32: #{tpu_custom_call.1} parent=11 // pred_fallthru
          _
        // Predicated region
        $region33: #{tpu_custom_call.1} parent=11 // pred_check
          %p382 = pneg %p212
        $region34: #{tpu_custom_call.1} parent=11 // pred_check_branch
          %384 = sbr.rel (%p382) target = $region36
        $region35: #{tpu_custom_call.1} parent=11 // pred_region
          %s386 = ssub.s32 32, 32
          %387 = vsyncadd [#allocation15], %s386
          %s389 = sshll.u32 [#allocation14], 4
          %s390 = int_to_ptr.vmem [resolvable:$true] %s389
          %392 = dma.hbm_to_vmem [thread:$0]  %s7, 32, %s390, [#allocation15]
        $region36: #{tpu_custom_call.1} parent=11 // pred_fallthru
          _
        // Predicated region
        $region37: #{tpu_custom_call.1} parent=11 // pred_check
          %p393 = pneg %p233
        $region38: #{tpu_custom_call.1} parent=11 // pred_check_branch
          %395 = sbr.rel (%p393) target = $region40
        $region39: #{tpu_custom_call.1} parent=11 // pred_region
          %s397 = ssub.s32 4096, 4096
          %398 = vsyncadd [#allocation15], %s397
          %s399 = sshll.u32 [#allocation16], 4
          %s400 = int_to_ptr.vmem [resolvable:$true] %s399
          %405 = dma.hbm_to_vmem [thread:$0]  %s8, 4096, %s400, [#allocation15], 128, 128, 8
        $region40: #{tpu_custom_call.1} parent=11 // pred_fallthru
          _
        // Predicated region
        $region41: #{tpu_custom_call.1} parent=11 // pred_check
          %p406 = pneg %p254
        $region42: #{tpu_custom_call.1} parent=11 // pred_check_branch
          %408 = sbr.rel (%p406) target = $region44
        $region43: #{tpu_custom_call.1} parent=11 // pred_region
          %s410 = ssub.s32 32, 32
          %411 = vsyncadd [#allocation18], %s410
          %s413 = sshll.u32 [#allocation17], 4
          %s414 = int_to_ptr.vmem [resolvable:$true] %s413
          %416 = dma.hbm_to_vmem [thread:$0]  %s9, 32, %s414, [#allocation18]
        $region44: #{tpu_custom_call.1} parent=11 // pred_fallthru
          _
      $region12: #{tpu_custom_call.1} parent=5 // pred_fallthru
        _
      %p417 = scmp.lt.s32.totalorder %s34, 2
      // Predicated region
      $region45: #{tpu_custom_call.1} parent=5 // pred_check
        %p418 = pneg %p417
      $region46: #{tpu_custom_call.1} parent=5 // pred_check_branch
        %420 = sbr.rel (%p418) target = $region48
      $region47: #{tpu_custom_call.1} parent=5 // pred_region
        // Predicated region
        $region49: #{tpu_custom_call.1} parent=47 // pred_check
          %p421 = pneg %p54
        $region50: #{tpu_custom_call.1} parent=47 // pred_check_branch
          %423 = sbr.rel (%p421) target = $region52
        $region51: #{tpu_custom_call.1} parent=47 // pred_region
          %s424 = sand.u32 %s44, 1
          %s425 = scalar_lea.sflag [#allocation3], %s424
          %s426 = sand.u32 %s44, 1
          %s427 = smul.addr %s426, 256
          %s428 = scalar_lea.vmem [#allocation2], %s427
          %s429 = smul.u32 32, %s34
          %s431 = ssub.s32 4096, 4096
          %432 = vsyncadd %s425, %s431
          %s433 = smul.addr %s429, 2
          %s434 = smul.addr %s433, 64
          %s435 = scalar_lea.hbm %s0, %s434
          %s436 = sshll.u32 %s428, 4
          %s437 = int_to_ptr.vmem [resolvable:$true] %s436
          %442 = dma.hbm_to_vmem [thread:$0]  %s435, 4096, %s437, %s425, 128, 128, 8
        $region52: #{tpu_custom_call.1} parent=47 // pred_fallthru
          _
        // Predicated region
        $region53: #{tpu_custom_call.1} parent=47 // pred_check
          %p443 = pneg %p80
        $region54: #{tpu_custom_call.1} parent=47 // pred_check_branch
          %445 = sbr.rel (%p443) target = $region56
        $region55: #{tpu_custom_call.1} parent=47 // pred_region
          %s446 = sand.u32 %s34, 1
          %s447 = scalar_lea.sflag [#allocation6], %s446
          %s448 = sand.u32 %s70, 1
          %s449 = smul.addr %s448, 256
          %s450 = scalar_lea.vmem [#allocation5], %s449
          %s451 = smul.u32 32, %s34
          %s453 = ssub.s32 4096, 4096
          %454 = vsyncadd %s447, %s453
          %s455 = smul.addr %s451, 128
          %s456 = scalar_lea.hbm %s1, %s455
          %s457 = sshll.u32 %s450, 4
          %s458 = int_to_ptr.vmem [resolvable:$true] %s457
          %463 = dma.hbm_to_vmem [thread:$0]  %s456, 4096, %s458, %s447, 128, 128, 8
        $region56: #{tpu_custom_call.1} parent=47 // pred_fallthru
          _
      $region48: #{tpu_custom_call.1} parent=5 // pred_fallthru
        _
      %p464 = scmp.le.s32.totalorder 1, %s34
      %p465 = scmp.lt.s32.totalorder %s34, 3
      %p466 = pnand %p464, %p465
      %p467 = pneg %p466
      // Predicated region
      $region57: #{tpu_custom_call.1} parent=5 // pred_check
        _
      $region58: #{tpu_custom_call.1} parent=5 // pred_check_branch
        %469 = sbr.rel (%p466) target = $region60
      $region59: #{tpu_custom_call.1} parent=5 // pred_region
        %s470 = ssub.s32 %s34, 1
        %s471 = sand.u32 %s47, 1
        %s472 = scalar_lea.sflag [#allocation3], %s471
        %s473 = sand.u32 %s47, 1
        %s474 = smul.addr %s473, 256
        %s475 = scalar_lea.vmem [#allocation2], %s474
        // Predicated region
        $region61: #{tpu_custom_call.1} parent=59 // pred_check
          %p476 = pneg %p60
        $region62: #{tpu_custom_call.1} parent=59 // pred_check_branch
          %478 = sbr.rel (%p476) target = $region64
        $region63: #{tpu_custom_call.1} parent=59 // pred_region
          %479 = dma.done %s472, 4096
        $region64: #{tpu_custom_call.1} parent=59 // pred_fallthru
          _
        %s480 = sand.u32 %s39, 1
        %s481 = scalar_lea.sflag [#allocation6], %s480
        %s482 = sand.u32 %s73, 1
        %s483 = smul.addr %s482, 256
        %s484 = scalar_lea.vmem [#allocation5], %s483
        // Predicated region
        $region65: #{tpu_custom_call.1} parent=59 // pred_check
          %p485 = pneg %p86
        $region66: #{tpu_custom_call.1} parent=59 // pred_check_branch
          %487 = sbr.rel (%p485) target = $region68
        $region67: #{tpu_custom_call.1} parent=59 // pred_region
          %488 = dma.done %s481, 4096
        $region68: #{tpu_custom_call.1} parent=59 // pred_fallthru
          _
        // Predicated region
        $region69: #{tpu_custom_call.1} parent=59 // pred_check
          %p489 = pneg %p107
        $region70: #{tpu_custom_call.1} parent=59 // pred_check_branch
          %491 = sbr.rel (%p489) target = $region72
        $region71: #{tpu_custom_call.1} parent=59 // pred_region
          %492 = dma.done [#allocation6], 4096
        $region72: #{tpu_custom_call.1} parent=59 // pred_fallthru
          _
        // Predicated region
        $region73: #{tpu_custom_call.1} parent=59 // pred_check
          %p493 = pneg %p128
        $region74: #{tpu_custom_call.1} parent=59 // pred_check_branch
          %495 = sbr.rel (%p493) target = $region76
        $region75: #{tpu_custom_call.1} parent=59 // pred_region
          %496 = dma.done [#allocation9], 32
        $region76: #{tpu_custom_call.1} parent=59 // pred_fallthru
          _
        // Predicated region
        $region77: #{tpu_custom_call.1} parent=59 // pred_check
          %p497 = pneg %p149
        $region78: #{tpu_custom_call.1} parent=59 // pred_check_branch
          %499 = sbr.rel (%p497) target = $region80
        $region79: #{tpu_custom_call.1} parent=59 // pred_region
          %500 = dma.done [#allocation9], 2048
        $region80: #{tpu_custom_call.1} parent=59 // pred_fallthru
          _
        // Predicated region
        $region81: #{tpu_custom_call.1} parent=59 // pred_check
          %p501 = pneg %p170
        $region82: #{tpu_custom_call.1} parent=59 // pred_check_branch
          %503 = sbr.rel (%p501) target = $region84
        $region83: #{tpu_custom_call.1} parent=59 // pred_region
          %504 = dma.done [#allocation12], 16
        $region84: #{tpu_custom_call.1} parent=59 // pred_fallthru
          _
        // Predicated region
        $region85: #{tpu_custom_call.1} parent=59 // pred_check
          %p505 = pneg %p191
        $region86: #{tpu_custom_call.1} parent=59 // pred_check_branch
          %507 = sbr.rel (%p505) target = $region88
        $region87: #{tpu_custom_call.1} parent=59 // pred_region
          %508 = dma.done [#allocation12], 256
        $region88: #{tpu_custom_call.1} parent=59 // pred_fallthru
          _
        // Predicated region
        $region89: #{tpu_custom_call.1} parent=59 // pred_check
          %p509 = pneg %p212
        $region90: #{tpu_custom_call.1} parent=59 // pred_check_branch
          %511 = sbr.rel (%p509) target = $region92
        $region91: #{tpu_custom_call.1} parent=59 // pred_region
          %512 = dma.done [#allocation15], 32
        $region92: #{tpu_custom_call.1} parent=59 // pred_fallthru
          _
        // Predicated region
        $region93: #{tpu_custom_call.1} parent=59 // pred_check
          %p513 = pneg %p233
        $region94: #{tpu_custom_call.1} parent=59 // pred_check_branch
          %515 = sbr.rel (%p513) target = $region96
        $region95: #{tpu_custom_call.1} parent=59 // pred_region
          %516 = dma.done [#allocation15], 4096
        $region96: #{tpu_custom_call.1} parent=59 // pred_fallthru
          _
        // Predicated region
        $region97: #{tpu_custom_call.1} parent=59 // pred_check
          %p517 = pneg %p254
        $region98: #{tpu_custom_call.1} parent=59 // pred_check_branch
          %519 = sbr.rel (%p517) target = $region100
        $region99: #{tpu_custom_call.1} parent=59 // pred_region
          %520 = dma.done [#allocation18], 32
        $region100: #{tpu_custom_call.1} parent=59 // pred_fallthru
          _
        %s521 = sand.u32 %s47, 1
        %s522 = scalar_lea.sflag [#allocation3], %s521
        %s523 = sand.u32 %s47, 1
        %s524 = smul.addr %s523, 256
        %s525 = scalar_lea.vmem [#allocation2], %s524
        %p526 = pneg %p60
        %p527 = pneg %p57
        %s528 = sand.u32 %s39, 1
        %s529 = scalar_lea.sflag [#allocation6], %s528
        %s530 = sand.u32 %s73, 1
        %s531 = smul.addr %s530, 256
        %s532 = scalar_lea.vmem [#allocation5], %s531
        %p533 = pneg %p86
        %p534 = pneg %p83
        %p535 = pneg %p107
        %p536 = pneg %p104
        %p537 = pneg %p128
        %p538 = pneg %p125
        %p539 = pneg %p149
        %p540 = pneg %p146
        %p541 = pneg %p170
        %p542 = pneg %p167
        %p543 = pneg %p191
        %p544 = pneg %p188
        %p545 = pneg %p212
        %p546 = pneg %p209
        %p547 = pneg %p233
        %p548 = pneg %p230
        %p549 = pneg %p254
        %p550 = pneg %p251
        %p551 = pneg %p280
        %p552 = pneg %p277
        %s553 = sand.u32 %s267, 1
        %s554 = scalar_lea.sflag [#allocation4], %s553
        %s555 = sand.u32 %s267, 1
        %s556 = smul.addr %s555, 256
        %s557 = scalar_lea.vmem [#allocation19], %s556
        %p558 = pneg %p306
        %p559 = pneg %p303
        %s560 = sand.u32 %s293, 1
        %s561 = scalar_lea.sflag [#allocation21], %s560
        %s562 = sand.u32 %s293, 1
        %s563 = smul.addr %s562, 256
        %s564 = scalar_lea.vmem [#allocation20], %s563
        %s565 = smul.u32 32, %s39
        %s566 = smul.u32 32, %s39
        %s567 = smul.u32 32, %s39
        %s568 = smul.u32 32, %s39
        %v570 = vld [vmem:[%s475] sm:$0xff]
        %v571 = vld [vmem:[%s475 + $0x8] sm:$0xff]
        %v572 = vld [vmem:[%s475 + $0x10] sm:$0xff]
        %v573 = vld [vmem:[%s475 + $0x18] sm:$0xff]
        %v574 = vld [vmem:[%s475 + $0x20] sm:$0xff]
        %v575 = vld [vmem:[%s475 + $0x28] sm:$0xff]
        %v576 = vld [vmem:[%s475 + $0x30] sm:$0xff]
        %v577 = vld [vmem:[%s475 + $0x38] sm:$0xff]
        %v578 = vld [vmem:[%s475 + $0x40] sm:$0xff]
        %v579 = vld [vmem:[%s475 + $0x48] sm:$0xff]
        %v580 = vld [vmem:[%s475 + $0x50] sm:$0xff]
        %v581 = vld [vmem:[%s475 + $0x58] sm:$0xff]
        %v582 = vld [vmem:[%s475 + $0x60] sm:$0xff]
        %v583 = vld [vmem:[%s475 + $0x68] sm:$0xff]
        %v584 = vld [vmem:[%s475 + $0x70] sm:$0xff]
        %v585 = vld [vmem:[%s475 + $0x78] sm:$0xff]
        %v586 = vld [vmem:[%s475 + $0x80] sm:$0xff]
        %v587 = vld [vmem:[%s475 + $0x88] sm:$0xff]
        %v588 = vld [vmem:[%s475 + $0x90] sm:$0xff]
        %v589 = vld [vmem:[%s475 + $0x98] sm:$0xff]
        %v590 = vld [vmem:[%s475 + $0xa0] sm:$0xff]
        %v591 = vld [vmem:[%s475 + $0xa8] sm:$0xff]
        %v592 = vld [vmem:[%s475 + $0xb0] sm:$0xff]
        %v593 = vld [vmem:[%s475 + $0xb8] sm:$0xff]
        %v594 = vld [vmem:[%s475 + $0xc0] sm:$0xff]
        %v595 = vld [vmem:[%s475 + $0xc8] sm:$0xff]
        %v596 = vld [vmem:[%s475 + $0xd0] sm:$0xff]
        %v597 = vld [vmem:[%s475 + $0xd8] sm:$0xff]
        %v598 = vld [vmem:[%s475 + $0xe0] sm:$0xff]
        %v599 = vld [vmem:[%s475 + $0xe8] sm:$0xff]
        %v600 = vld [vmem:[%s475 + $0xf0] sm:$0xff]
        %v601 = vld [vmem:[%s475 + $0xf8] sm:$0xff]
        %v602 = vld [vmem:[#allocation7] sm:$0xff]
        %v603 = vld [vmem:[#allocation7 + $0x8] sm:$0xff]
        %v604 = vld [vmem:[#allocation7 + $0x10] sm:$0xff]
        %v605 = vld [vmem:[#allocation7 + $0x18] sm:$0xff]
        %v606 = vld [vmem:[#allocation7 + $0x20] sm:$0xff]
        %v607 = vld [vmem:[#allocation7 + $0x28] sm:$0xff]
        %v608 = vld [vmem:[#allocation7 + $0x30] sm:$0xff]
        %v609 = vld [vmem:[#allocation7 + $0x38] sm:$0xff]
        %v610 = vld [vmem:[#allocation7 + $0x40] sm:$0xff]
        %v611 = vld [vmem:[#allocation7 + $0x48] sm:$0xff]
        %v612 = vld [vmem:[#allocation7 + $0x50] sm:$0xff]
        %v613 = vld [vmem:[#allocation7 + $0x58] sm:$0xff]
        %v614 = vld [vmem:[#allocation7 + $0x60] sm:$0xff]
        %v615 = vld [vmem:[#allocation7 + $0x68] sm:$0xff]
        %v616 = vld [vmem:[#allocation7 + $0x70] sm:$0xff]
        %v617 = vld [vmem:[#allocation7 + $0x78] sm:$0xff]
        %v618 = vld [vmem:[#allocation7 + $0x80] sm:$0xff]
        %v619 = vld [vmem:[#allocation7 + $0x88] sm:$0xff]
        %v620 = vld [vmem:[#allocation7 + $0x90] sm:$0xff]
        %v621 = vld [vmem:[#allocation7 + $0x98] sm:$0xff]
        %v622 = vld [vmem:[#allocation7 + $0xa0] sm:$0xff]
        %v623 = vld [vmem:[#allocation7 + $0xa8] sm:$0xff]
        %v624 = vld [vmem:[#allocation7 + $0xb0] sm:$0xff]
        %v625 = vld [vmem:[#allocation7 + $0xb8] sm:$0xff]
        %v626 = vld [vmem:[#allocation7 + $0xc0] sm:$0xff]
        %v627 = vld [vmem:[#allocation7 + $0xc8] sm:$0xff]
        %v628 = vld [vmem:[#allocation7 + $0xd0] sm:$0xff]
        %v629 = vld [vmem:[#allocation7 + $0xd8] sm:$0xff]
        %v630 = vld [vmem:[#allocation7 + $0xe0] sm:$0xff]
        %v631 = vld [vmem:[#allocation7 + $0xe8] sm:$0xff]
        %v632 = vld [vmem:[#allocation7 + $0xf0] sm:$0xff]
        %v633 = vld [vmem:[#allocation7 + $0xf8] sm:$0xff]
        %v634 = vld [vmem:[#allocation8] sm:$0x3]
        %v636 = vlaneseq
        %v637 = vshrl.u32 %v636, 7
        %v638 = vsub.s32 0, %v637
        %v639 = vrot.slane %v634, %v638
        %v640 = vlaneseq
        %v641 = vshrl.u32 %v640, 7
        %v642 = vsub.s32 1, %v641
        %v643 = vrot.slane %v634, %v642
        %v678 = vunpack.c.l.b16 %v570
        %v679 = vunpack.c.h.b16 %v570
        %v680 = vunpack.c.l.b16 %v571
        %v681 = vunpack.c.h.b16 %v571
        %v682 = vunpack.c.l.b16 %v572
        %v683 = vunpack.c.h.b16 %v572
        %v684 = vunpack.c.l.b16 %v573
        %v685 = vunpack.c.h.b16 %v573
        %v686 = vunpack.c.l.b16 %v574
        %v687 = vunpack.c.h.b16 %v574
        %v688 = vunpack.c.l.b16 %v575
        %v689 = vunpack.c.h.b16 %v575
        %v690 = vunpack.c.l.b16 %v576
        %v691 = vunpack.c.h.b16 %v576
        %v692 = vunpack.c.l.b16 %v577
        %v693 = vunpack.c.h.b16 %v577
        %v694 = vunpack.c.l.b16 %v578
        %v695 = vunpack.c.h.b16 %v578
        %v696 = vunpack.c.l.b16 %v579
        %v697 = vunpack.c.h.b16 %v579
        %v698 = vunpack.c.l.b16 %v580
        %v699 = vunpack.c.h.b16 %v580
        %v700 = vunpack.c.l.b16 %v581
        %v701 = vunpack.c.h.b16 %v581
        %v702 = vunpack.c.l.b16 %v582
        %v703 = vunpack.c.h.b16 %v582
        %v704 = vunpack.c.l.b16 %v583
        %v705 = vunpack.c.h.b16 %v583
        %v706 = vunpack.c.l.b16 %v584
        %v707 = vunpack.c.h.b16 %v584
        %v708 = vunpack.c.l.b16 %v585
        %v709 = vunpack.c.h.b16 %v585
        %v710 = vunpack.c.l.b16 %v586
        %v711 = vunpack.c.h.b16 %v586
        %v712 = vunpack.c.l.b16 %v587
        %v713 = vunpack.c.h.b16 %v587
        %v714 = vunpack.c.l.b16 %v588
        %v715 = vunpack.c.h.b16 %v588
        %v716 = vunpack.c.l.b16 %v589
        %v717 = vunpack.c.h.b16 %v589
        %v718 = vunpack.c.l.b16 %v590
        %v719 = vunpack.c.h.b16 %v590
        %v720 = vunpack.c.l.b16 %v591
        %v721 = vunpack.c.h.b16 %v591
        %v722 = vunpack.c.l.b16 %v592
        %v723 = vunpack.c.h.b16 %v592
        %v724 = vunpack.c.l.b16 %v593
        %v725 = vunpack.c.h.b16 %v593
        %v726 = vunpack.c.l.b16 %v594
        %v727 = vunpack.c.h.b16 %v594
        %v728 = vunpack.c.l.b16 %v595
        %v729 = vunpack.c.h.b16 %v595
        %v730 = vunpack.c.l.b16 %v596
        %v731 = vunpack.c.h.b16 %v596
        %v732 = vunpack.c.l.b16 %v597
        %v733 = vunpack.c.h.b16 %v597
        %v734 = vunpack.c.l.b16 %v598
        %v735 = vunpack.c.h.b16 %v598
        %v736 = vunpack.c.l.b16 %v599
        %v737 = vunpack.c.h.b16 %v599
        %v738 = vunpack.c.l.b16 %v600
        %v739 = vunpack.c.h.b16 %v600
        %v740 = vunpack.c.l.b16 %v601
        %v741 = vunpack.c.h.b16 %v601
        %v742 = vpack.c.b16 %v680, %v678
        %v743 = vpack.c.b16 %v681, %v679
        %v744 = vpack.c.b16 %v684, %v682
        %v745 = vpack.c.b16 %v685, %v683
        %v746 = vpack.c.b16 %v688, %v686
        %v747 = vpack.c.b16 %v689, %v687
        %v748 = vpack.c.b16 %v692, %v690
        %v749 = vpack.c.b16 %v693, %v691
        %v750 = vpack.c.b16 %v696, %v694
        %v751 = vpack.c.b16 %v697, %v695
        %v752 = vpack.c.b16 %v700, %v698
        %v753 = vpack.c.b16 %v701, %v699
        %v754 = vpack.c.b16 %v704, %v702
        %v755 = vpack.c.b16 %v705, %v703
        %v756 = vpack.c.b16 %v708, %v706
        %v757 = vpack.c.b16 %v709, %v707
        %v758 = vpack.c.b16 %v712, %v710
        %v759 = vpack.c.b16 %v713, %v711
        %v760 = vpack.c.b16 %v716, %v714
        %v761 = vpack.c.b16 %v717, %v715
        %v762 = vpack.c.b16 %v720, %v718
        %v763 = vpack.c.b16 %v721, %v719
        %v764 = vpack.c.b16 %v724, %v722
        %v765 = vpack.c.b16 %v725, %v723
        %v766 = vpack.c.b16 %v728, %v726
        %v767 = vpack.c.b16 %v729, %v727
        %v768 = vpack.c.b16 %v732, %v730
        %v769 = vpack.c.b16 %v733, %v731
        %v770 = vpack.c.b16 %v736, %v734
        %v771 = vpack.c.b16 %v737, %v735
        %v772 = vpack.c.b16 %v740, %v738
        %v773 = vpack.c.b16 %v741, %v739
        %v838 = vunpack.c.l.b16 %v602
        %v839 = vunpack.c.h.b16 %v602
        %v840 = vunpack.c.l.b16 %v603
        %v841 = vunpack.c.h.b16 %v603
        %v842 = vunpack.c.l.b16 %v604
        %v843 = vunpack.c.h.b16 %v604
        %v844 = vunpack.c.l.b16 %v605
        %v845 = vunpack.c.h.b16 %v605
        %v846 = vunpack.c.l.b16 %v606
        %v847 = vunpack.c.h.b16 %v606
        %v848 = vunpack.c.l.b16 %v607
        %v849 = vunpack.c.h.b16 %v607
        %v850 = vunpack.c.l.b16 %v608
        %v851 = vunpack.c.h.b16 %v608
        %v852 = vunpack.c.l.b16 %v609
        %v853 = vunpack.c.h.b16 %v609
        %v854 = vunpack.c.l.b16 %v610
        %v855 = vunpack.c.h.b16 %v610
        %v856 = vunpack.c.l.b16 %v611
        %v857 = vunpack.c.h.b16 %v611
        %v858 = vunpack.c.l.b16 %v612
        %v859 = vunpack.c.h.b16 %v612
        %v860 = vunpack.c.l.b16 %v613
        %v861 = vunpack.c.h.b16 %v613
        %v862 = vunpack.c.l.b16 %v614
        %v863 = vunpack.c.h.b16 %v614
        %v864 = vunpack.c.l.b16 %v615
        %v865 = vunpack.c.h.b16 %v615
        %v866 = vunpack.c.l.b16 %v616
        %v867 = vunpack.c.h.b16 %v616
        %v868 = vunpack.c.l.b16 %v617
        %v869 = vunpack.c.h.b16 %v617
        %v870 = vunpack.c.l.b16 %v618
        %v871 = vunpack.c.h.b16 %v618
        %v872 = vunpack.c.l.b16 %v619
        %v873 = vunpack.c.h.b16 %v619
        %v874 = vunpack.c.l.b16 %v620
        %v875 = vunpack.c.h.b16 %v620
        %v876 = vunpack.c.l.b16 %v621
        %v877 = vunpack.c.h.b16 %v621
        %v878 = vunpack.c.l.b16 %v622
        %v879 = vunpack.c.h.b16 %v622
        %v880 = vunpack.c.l.b16 %v623
        %v881 = vunpack.c.h.b16 %v623
        %v882 = vunpack.c.l.b16 %v624
        %v883 = vunpack.c.h.b16 %v624
        %v884 = vunpack.c.l.b16 %v625
        %v885 = vunpack.c.h.b16 %v625
        %v886 = vunpack.c.l.b16 %v626
        %v887 = vunpack.c.h.b16 %v626
        %v888 = vunpack.c.l.b16 %v627
        %v889 = vunpack.c.h.b16 %v627
        %v890 = vunpack.c.l.b16 %v628
        %v891 = vunpack.c.h.b16 %v628
        %v892 = vunpack.c.l.b16 %v629
        %v893 = vunpack.c.h.b16 %v629
        %v894 = vunpack.c.l.b16 %v630
        %v895 = vunpack.c.h.b16 %v630
        %v896 = vunpack.c.l.b16 %v631
        %v897 = vunpack.c.h.b16 %v631
        %v898 = vunpack.c.l.b16 %v632
        %v899 = vunpack.c.h.b16 %v632
        %v900 = vunpack.c.l.b16 %v633
        %v901 = vunpack.c.h.b16 %v633
        %v902 = vpack.c.b16 %v840, %v838
        %v903 = vpack.c.b16 %v841, %v839
        %v904 = vpack.c.b16 %v844, %v842
        %v905 = vpack.c.b16 %v845, %v843
        %v906 = vpack.c.b16 %v848, %v846
        %v907 = vpack.c.b16 %v849, %v847
        %v908 = vpack.c.b16 %v852, %v850
        %v909 = vpack.c.b16 %v853, %v851
        %v910 = vpack.c.b16 %v856, %v854
        %v911 = vpack.c.b16 %v857, %v855
        %v912 = vpack.c.b16 %v860, %v858
        %v913 = vpack.c.b16 %v861, %v859
        %v914 = vpack.c.b16 %v864, %v862
        %v915 = vpack.c.b16 %v865, %v863
        %v916 = vpack.c.b16 %v868, %v866
        %v917 = vpack.c.b16 %v869, %v867
        %v918 = vpack.c.b16 %v872, %v870
        %v919 = vpack.c.b16 %v873, %v871
        %v920 = vpack.c.b16 %v876, %v874
        %v921 = vpack.c.b16 %v877, %v875
        %v922 = vpack.c.b16 %v880, %v878
        %v923 = vpack.c.b16 %v881, %v879
        %v924 = vpack.c.b16 %v884, %v882
        %v925 = vpack.c.b16 %v885, %v883
        %v926 = vpack.c.b16 %v888, %v886
        %v927 = vpack.c.b16 %v889, %v887
        %v928 = vpack.c.b16 %v892, %v890
        %v929 = vpack.c.b16 %v893, %v891
        %v930 = vpack.c.b16 %v896, %v894
        %v931 = vpack.c.b16 %v897, %v895
        %v932 = vpack.c.b16 %v900, %v898
        %v933 = vpack.c.b16 %v901, %v899
        %966 = vmatprep.subr.bf16.mxu0 %v903
        %967 = vmatpush1.bf16.msra.mxu0 %v902
        %968 = vmatprep.subr.bf16.mxu0 %v905
        %969 = vmatpush1.bf16.msra.mxu0 %v904
        %970 = vmatprep.subr.bf16.mxu0 %v907
        %971 = vmatpush1.bf16.msra.mxu0 %v906
        %972 = vmatprep.subr.bf16.mxu0 %v909
        %973 = vmatpush1.bf16.msra.mxu0 %v908
        %974 = vmatprep.subr.bf16.mxu0 %v911
        %975 = vmatpush1.bf16.msra.mxu0 %v910
        %976 = vmatprep.subr.bf16.mxu0 %v913
        %977 = vmatpush1.bf16.msra.mxu0 %v912
        %978 = vmatprep.subr.bf16.mxu0 %v915
        %979 = vmatpush1.bf16.msra.mxu0 %v914
        %980 = vmatprep.subr.bf16.mxu0 %v917
        %981 = vmatpush1.bf16.msra.mxu0 %v916
        %982 = vmatprep.subr.bf16.mxu0 %v919
        %983 = vmatpush1.bf16.msra.mxu0 %v918
        %984 = vmatprep.subr.bf16.mxu0 %v921
        %985 = vmatpush1.bf16.msra.mxu0 %v920
        %986 = vmatprep.subr.bf16.mxu0 %v923
        %987 = vmatpush1.bf16.msra.mxu0 %v922
        %988 = vmatprep.subr.bf16.mxu0 %v925
        %989 = vmatpush1.bf16.msra.mxu0 %v924
        %990 = vmatprep.subr.bf16.mxu0 %v927
        %991 = vmatpush1.bf16.msra.mxu0 %v926
        %992 = vmatprep.subr.bf16.mxu0 %v929
        %993 = vmatpush1.bf16.msra.mxu0 %v928
        %994 = vmatprep.subr.bf16.mxu0 %v931
        %995 = vmatpush1.bf16.msra.mxu0 %v930
        %996 = vmatprep.subr.bf16.mxu0 %v933
        %997 = vmatpush1.bf16.msra.mxu0 %v932
        %998 = vmatprep.mubr.bf16.mxu0 %v743
        %999 = vmatmul.mubr.bf16.gmra.mrb[0].mxu0 %v742
        %v1000 = vpop.f32.mrb[0].mxu0
        %v1001 = vadd.f32 %v639, %v1000
        %v1002 = vpop.f32.mrb[0].mxu0
        %v1003 = vadd.f32 %v643, %v1002
        %v1004 = vpop.f32.mrb[0].mxu0
        %v1005 = vadd.f32 %v639, %v1004
        %v1006 = vpop.f32.mrb[0].mxu0
        %v1007 = vadd.f32 %v643, %v1006
        %1008 = vmatprep.mubr.bf16.mxu0 %v745
        %1009 = vmatmul.mubr.bf16.gmra.mrb[0].mxu0 %v744
        %v1010 = vpop.f32.mrb[0].mxu0
        %v1011 = vadd.f32 %v639, %v1010
        %v1012 = vpop.f32.mrb[0].mxu0
        %v1013 = vadd.f32 %v643, %v1012
        %v1014 = vpop.f32.mrb[0].mxu0
        %v1015 = vadd.f32 %v639, %v1014
        %v1016 = vpop.f32.mrb[0].mxu0
        %v1017 = vadd.f32 %v643, %v1016
        %1018 = vmatprep.mubr.bf16.mxu0 %v747
        %1019 = vmatmul.mubr.bf16.gmra.mrb[0].mxu0 %v746
        %v1020 = vpop.f32.mrb[0].mxu0
        %v1021 = vadd.f32 %v639, %v1020
        %v1022 = vpop.f32.mrb[0].mxu0
        %v1023 = vadd.f32 %v643, %v1022
        %v1024 = vpop.f32.mrb[0].mxu0
        %v1025 = vadd.f32 %v639, %v1024
        %v1026 = vpop.f32.mrb[0].mxu0
        %v1027 = vadd.f32 %v643, %v1026
        %1028 = vmatprep.mubr.bf16.mxu0 %v749
        %1029 = vmatmul.mubr.bf16.gmra.mrb[0].mxu0 %v748
        %v1030 = vpop.f32.mrb[0].mxu0
        %v1031 = vadd.f32 %v639, %v1030
        %v1032 = vpop.f32.mrb[0].mxu0
        %v1033 = vadd.f32 %v643, %v1032
        %v1034 = vpop.f32.mrb[0].mxu0
        %v1035 = vadd.f32 %v639, %v1034
        %v1036 = vpop.f32.mrb[0].mxu0
        %v1037 = vadd.f32 %v643, %v1036
        %1038 = vmatprep.mubr.bf16.mxu0 %v751
        %1039 = vmatmul.mubr.bf16.gmra.mrb[0].mxu0 %v750
        %v1040 = vpop.f32.mrb[0].mxu0
        %v1041 = vadd.f32 %v639, %v1040
        %v1042 = vpop.f32.mrb[0].mxu0
        %v1043 = vadd.f32 %v643, %v1042
        %v1044 = vpop.f32.mrb[0].mxu0
        %v1045 = vadd.f32 %v639, %v1044
        %v1046 = vpop.f32.mrb[0].mxu0
        %v1047 = vadd.f32 %v643, %v1046
        %1048 = vmatprep.mubr.bf16.mxu0 %v753
        %1049 = vmatmul.mubr.bf16.gmra.mrb[0].mxu0 %v752
        %v1050 = vpop.f32.mrb[0].mxu0
        %v1051 = vadd.f32 %v639, %v1050
        %v1052 = vpop.f32.mrb[0].mxu0
        %v1053 = vadd.f32 %v643, %v1052
        %v1054 = vpop.f32.mrb[0].mxu0
        %v1055 = vadd.f32 %v639, %v1054
        %v1056 = vpop.f32.mrb[0].mxu0
        %v1057 = vadd.f32 %v643, %v1056
        %1058 = vmatprep.mubr.bf16.mxu0 %v755
        %1059 = vmatmul.mubr.bf16.gmra.mrb[0].mxu0 %v754
        %v1060 = vpop.f32.mrb[0].mxu0
        %v1061 = vadd.f32 %v639, %v1060
        %v1062 = vpop.f32.mrb[0].mxu0
        %v1063 = vadd.f32 %v643, %v1062
        %v1064 = vpop.f32.mrb[0].mxu0
        %v1065 = vadd.f32 %v639, %v1064
        %v1066 = vpop.f32.mrb[0].mxu0
        %v1067 = vadd.f32 %v643, %v1066
        %1068 = vmatprep.mubr.bf16.mxu0 %v757
        %1069 = vmatmul.mubr.bf16.gmra.mrb[0].mxu0 %v756
        %v1070 = vpop.f32.mrb[0].mxu0
        %v1071 = vadd.f32 %v639, %v1070
        %v1072 = vpop.f32.mrb[0].mxu0
        %v1073 = vadd.f32 %v643, %v1072
        %v1074 = vpop.f32.mrb[0].mxu0
        %v1075 = vadd.f32 %v639, %v1074
        %v1076 = vpop.f32.mrb[0].mxu0
        %v1077 = vadd.f32 %v643, %v1076
        %1078 = vmatprep.mubr.bf16.mxu0 %v759
        %1079 = vmatmul.mubr.bf16.gmra.mrb[0].mxu0 %v758
        %v1080 = vpop.f32.mrb[0].mxu0
        %v1081 = vadd.f32 %v639, %v1080
        %v1082 = vpop.f32.mrb[0].mxu0
        %v1083 = vadd.f32 %v643, %v1082
        %v1084 = vpop.f32.mrb[0].mxu0
        %v1085 = vadd.f32 %v639, %v1084
        %v1086 = vpop.f32.mrb[0].mxu0
        %v1087 = vadd.f32 %v643, %v1086
        %1088 = vmatprep.mubr.bf16.mxu0 %v761
        %1089 = vmatmul.mubr.bf16.gmra.mrb[0].mxu0 %v760
        %v1090 = vpop.f32.mrb[0].mxu0
        %v1091 = vadd.f32 %v639, %v1090
        %v1092 = vpop.f32.mrb[0].mxu0
        %v1093 = vadd.f32 %v643, %v1092
        %v1094 = vpop.f32.mrb[0].mxu0
        %v1095 = vadd.f32 %v639, %v1094
        %v1096 = vpop.f32.mrb[0].mxu0
        %v1097 = vadd.f32 %v643, %v1096
        %1098 = vmatprep.mubr.bf16.mxu0 %v763
        %1099 = vmatmul.mubr.bf16.gmra.mrb[0].mxu0 %v762
        %v1100 = vpop.f32.mrb[0].mxu0
        %v1101 = vadd.f32 %v639, %v1100
        %v1102 = vpop.f32.mrb[0].mxu0
        %v1103 = vadd.f32 %v643, %v1102
        %v1104 = vpop.f32.mrb[0].mxu0
        %v1105 = vadd.f32 %v639, %v1104
        %v1106 = vpop.f32.mrb[0].mxu0
        %v1107 = vadd.f32 %v643, %v1106
        %1108 = vmatprep.mubr.bf16.mxu0 %v765
        %1109 = vmatmul.mubr.bf16.gmra.mrb[0].mxu0 %v764
        %v1110 = vpop.f32.mrb[0].mxu0
        %v1111 = vadd.f32 %v639, %v1110
        %v1112 = vpop.f32.mrb[0].mxu0
        %v1113 = vadd.f32 %v643, %v1112
        %v1114 = vpop.f32.mrb[0].mxu0
        %v1115 = vadd.f32 %v639, %v1114
        %v1116 = vpop.f32.mrb[0].mxu0
        %v1117 = vadd.f32 %v643, %v1116
        %1118 = vmatprep.mubr.bf16.mxu0 %v767
        %1119 = vmatmul.mubr.bf16.gmra.mrb[0].mxu0 %v766
        %v1120 = vpop.f32.mrb[0].mxu0
        %v1121 = vadd.f32 %v639, %v1120
        %v1122 = vpop.f32.mrb[0].mxu0
        %v1123 = vadd.f32 %v643, %v1122
        %v1124 = vpop.f32.mrb[0].mxu0
        %v1125 = vadd.f32 %v639, %v1124
        %v1126 = vpop.f32.mrb[0].mxu0
        %v1127 = vadd.f32 %v643, %v1126
        %1128 = vmatprep.mubr.bf16.mxu0 %v769
        %1129 = vmatmul.mubr.bf16.gmra.mrb[0].mxu0 %v768
        %v1130 = vpop.f32.mrb[0].mxu0
        %v1131 = vadd.f32 %v639, %v1130
        %v1132 = vpop.f32.mrb[0].mxu0
        %v1133 = vadd.f32 %v643, %v1132
        %v1134 = vpop.f32.mrb[0].mxu0
        %v1135 = vadd.f32 %v639, %v1134
        %v1136 = vpop.f32.mrb[0].mxu0
        %v1137 = vadd.f32 %v643, %v1136
        %1138 = vmatprep.mubr.bf16.mxu0 %v771
        %1139 = vmatmul.mubr.bf16.gmra.mrb[0].mxu0 %v770
        %v1140 = vpop.f32.mrb[0].mxu0
        %v1141 = vadd.f32 %v639, %v1140
        %v1142 = vpop.f32.mrb[0].mxu0
        %v1143 = vadd.f32 %v643, %v1142
        %v1144 = vpop.f32.mrb[0].mxu0
        %v1145 = vadd.f32 %v639, %v1144
        %v1146 = vpop.f32.mrb[0].mxu0
        %v1147 = vadd.f32 %v643, %v1146
        %1148 = vmatprep.mubr.bf16.mxu0 %v773
        %1149 = vmatmul.mubr.bf16.gmra.mrb[0].mxu0 %v772
        %v1150 = vpop.f32.mrb[0].mxu0
        %v1151 = vadd.f32 %v639, %v1150
        %v1152 = vpop.f32.mrb[0].mxu0
        %v1153 = vadd.f32 %v643, %v1152
        %v1154 = vpop.f32.mrb[0].mxu0
        %v1155 = vadd.f32 %v639, %v1154
        %v1156 = vpop.f32.mrb[0].mxu0
        %v1157 = vadd.f32 %v643, %v1156
        %1158 = vdwg.mxu0
        %v1159 = vmax.f32 %v1001, 0.0
        %v1160 = vmax.f32 %v1003, 0.0
        %v1161 = vmax.f32 %v1005, 0.0
        %v1162 = vmax.f32 %v1007, 0.0
        %v1163 = vmax.f32 %v1011, 0.0
        %v1164 = vmax.f32 %v1013, 0.0
        %v1165 = vmax.f32 %v1015, 0.0
        %v1166 = vmax.f32 %v1017, 0.0
        %v1167 = vmax.f32 %v1021, 0.0
        %v1168 = vmax.f32 %v1023, 0.0
        %v1169 = vmax.f32 %v1025, 0.0
        %v1170 = vmax.f32 %v1027, 0.0
        %v1171 = vmax.f32 %v1031, 0.0
        %v1172 = vmax.f32 %v1033, 0.0
        %v1173 = vmax.f32 %v1035, 0.0
        %v1174 = vmax.f32 %v1037, 0.0
        %v1175 = vmax.f32 %v1041, 0.0
        %v1176 = vmax.f32 %v1043, 0.0
        %v1177 = vmax.f32 %v1045, 0.0
        %v1178 = vmax.f32 %v1047, 0.0
        %v1179 = vmax.f32 %v1051, 0.0
        %v1180 = vmax.f32 %v1053, 0.0
        %v1181 = vmax.f32 %v1055, 0.0
        %v1182 = vmax.f32 %v1057, 0.0
        %v1183 = vmax.f32 %v1061, 0.0
        %v1184 = vmax.f32 %v1063, 0.0
        %v1185 = vmax.f32 %v1065, 0.0
        %v1186 = vmax.f32 %v1067, 0.0
        %v1187 = vmax.f32 %v1071, 0.0
        %v1188 = vmax.f32 %v1073, 0.0
        %v1189 = vmax.f32 %v1075, 0.0
        %v1190 = vmax.f32 %v1077, 0.0
        %v1191 = vmax.f32 %v1081, 0.0
        %v1192 = vmax.f32 %v1083, 0.0
        %v1193 = vmax.f32 %v1085, 0.0
        %v1194 = vmax.f32 %v1087, 0.0
        %v1195 = vmax.f32 %v1091, 0.0
        %v1196 = vmax.f32 %v1093, 0.0
        %v1197 = vmax.f32 %v1095, 0.0
        %v1198 = vmax.f32 %v1097, 0.0
        %v1199 = vmax.f32 %v1101, 0.0
        %v1200 = vmax.f32 %v1103, 0.0
        %v1201 = vmax.f32 %v1105, 0.0
        %v1202 = vmax.f32 %v1107, 0.0
        %v1203 = vmax.f32 %v1111, 0.0
        %v1204 = vmax.f32 %v1113, 0.0
        %v1205 = vmax.f32 %v1115, 0.0
        %v1206 = vmax.f32 %v1117, 0.0
        %v1207 = vmax.f32 %v1121, 0.0
        %v1208 = vmax.f32 %v1123, 0.0
        %v1209 = vmax.f32 %v1125, 0.0
        %v1210 = vmax.f32 %v1127, 0.0
        %v1211 = vmax.f32 %v1131, 0.0
        %v1212 = vmax.f32 %v1133, 0.0
        %v1213 = vmax.f32 %v1135, 0.0
        %v1214 = vmax.f32 %v1137, 0.0
        %v1215 = vmax.f32 %v1141, 0.0
        %v1216 = vmax.f32 %v1143, 0.0
        %v1217 = vmax.f32 %v1145, 0.0
        %v1218 = vmax.f32 %v1147, 0.0
        %v1219 = vmax.f32 %v1151, 0.0
        %v1220 = vmax.f32 %v1153, 0.0
        %v1221 = vmax.f32 %v1155, 0.0
        %v1222 = vmax.f32 %v1157, 0.0
        %v1223 = vpack.c.bf16 %v1161, %v1159
        %v1224 = vpack.c.bf16 %v1162, %v1160
        %v1225 = vpack.c.bf16 %v1165, %v1163
        %v1226 = vpack.c.bf16 %v1166, %v1164
        %v1227 = vpack.c.bf16 %v1169, %v1167
        %v1228 = vpack.c.bf16 %v1170, %v1168
        %v1229 = vpack.c.bf16 %v1173, %v1171
        %v1230 = vpack.c.bf16 %v1174, %v1172
        %v1231 = vpack.c.bf16 %v1177, %v1175
        %v1232 = vpack.c.bf16 %v1178, %v1176
        %v1233 = vpack.c.bf16 %v1181, %v1179
        %v1234 = vpack.c.bf16 %v1182, %v1180
        %v1235 = vpack.c.bf16 %v1185, %v1183
        %v1236 = vpack.c.bf16 %v1186, %v1184
        %v1237 = vpack.c.bf16 %v1189, %v1187
        %v1238 = vpack.c.bf16 %v1190, %v1188
        %v1239 = vpack.c.bf16 %v1193, %v1191
        %v1240 = vpack.c.bf16 %v1194, %v1192
        %v1241 = vpack.c.bf16 %v1197, %v1195
        %v1242 = vpack.c.bf16 %v1198, %v1196
        %v1243 = vpack.c.bf16 %v1201, %v1199
        %v1244 = vpack.c.bf16 %v1202, %v1200
        %v1245 = vpack.c.bf16 %v1205, %v1203
        %v1246 = vpack.c.bf16 %v1206, %v1204
        %v1247 = vpack.c.bf16 %v1209, %v1207
        %v1248 = vpack.c.bf16 %v1210, %v1208
        %v1249 = vpack.c.bf16 %v1213, %v1211
        %v1250 = vpack.c.bf16 %v1214, %v1212
        %v1251 = vpack.c.bf16 %v1217, %v1215
        %v1252 = vpack.c.bf16 %v1218, %v1216
        %v1253 = vpack.c.bf16 %v1221, %v1219
        %v1254 = vpack.c.bf16 %v1222, %v1220
        %v1255 = vld [vmem:[#allocation10] sm:$0xf]
        %v1256 = vld [vmem:[#allocation10 + $0x4] sm:$0xf]
        %v1257 = vld [vmem:[#allocation10 + $0x8] sm:$0xf]
        %v1258 = vld [vmem:[#allocation10 + $0xc] sm:$0xf]
        %v1259 = vld [vmem:[#allocation10 + $0x10] sm:$0xf]
        %v1260 = vld [vmem:[#allocation10 + $0x14] sm:$0xf]
        %v1261 = vld [vmem:[#allocation10 + $0x18] sm:$0xf]
        %v1262 = vld [vmem:[#allocation10 + $0x1c] sm:$0xf]
        %v1263 = vld [vmem:[#allocation10 + $0x20] sm:$0xf]
        %v1264 = vld [vmem:[#allocation10 + $0x24] sm:$0xf]
        %v1265 = vld [vmem:[#allocation10 + $0x28] sm:$0xf]
        %v1266 = vld [vmem:[#allocation10 + $0x2c] sm:$0xf]
        %v1267 = vld [vmem:[#allocation10 + $0x30] sm:$0xf]
        %v1268 = vld [vmem:[#allocation10 + $0x34] sm:$0xf]
        %v1269 = vld [vmem:[#allocation10 + $0x38] sm:$0xf]
        %v1270 = vld [vmem:[#allocation10 + $0x3c] sm:$0xf]
        %v1271 = vld [vmem:[#allocation10 + $0x40] sm:$0xf]
        %v1272 = vld [vmem:[#allocation10 + $0x44] sm:$0xf]
        %v1273 = vld [vmem:[#allocation10 + $0x48] sm:$0xf]
        %v1274 = vld [vmem:[#allocation10 + $0x4c] sm:$0xf]
        %v1275 = vld [vmem:[#allocation10 + $0x50] sm:$0xf]
        %v1276 = vld [vmem:[#allocation10 + $0x54] sm:$0xf]
        %v1277 = vld [vmem:[#allocation10 + $0x58] sm:$0xf]
        %v1278 = vld [vmem:[#allocation10 + $0x5c] sm:$0xf]
        %v1279 = vld [vmem:[#allocation10 + $0x60] sm:$0xf]
        %v1280 = vld [vmem:[#allocation10 + $0x64] sm:$0xf]
        %v1281 = vld [vmem:[#allocation10 + $0x68] sm:$0xf]
        %v1282 = vld [vmem:[#allocation10 + $0x6c] sm:$0xf]
        %v1283 = vld [vmem:[#allocation10 + $0x70] sm:$0xf]
        %v1284 = vld [vmem:[#allocation10 + $0x74] sm:$0xf]
        %v1285 = vld [vmem:[#allocation10 + $0x78] sm:$0xf]
        %v1286 = vld [vmem:[#allocation10 + $0x7c] sm:$0xf]
        %v1287 = vld [vmem:[#allocation11] sm:$0x1]
        %v1289 = vlaneseq
        %v1290 = vshrl.u32 %v1289, 7
        %v1291 = vsub.s32 0, %v1290
        %v1292 = vrot.slane %v1287, %v1291
        %v1326 = vunpack.c.l.b16 %v1255
        %v1327 = vunpack.c.l.b16 %v1256
        %v1328 = vunpack.c.l.b16 %v1257
        %v1329 = vunpack.c.l.b16 %v1258
        %v1330 = vunpack.c.l.b16 %v1259
        %v1331 = vunpack.c.l.b16 %v1260
        %v1332 = vunpack.c.l.b16 %v1261
        %v1333 = vunpack.c.l.b16 %v1262
        %v1334 = vunpack.c.l.b16 %v1263
        %v1335 = vunpack.c.l.b16 %v1264
        %v1336 = vunpack.c.l.b16 %v1265
        %v1337 = vunpack.c.l.b16 %v1266
        %v1338 = vunpack.c.l.b16 %v1267
        %v1339 = vunpack.c.l.b16 %v1268
        %v1340 = vunpack.c.l.b16 %v1269
        %v1341 = vunpack.c.l.b16 %v1270
        %v1342 = vunpack.c.l.b16 %v1271
        %v1343 = vunpack.c.l.b16 %v1272
        %v1344 = vunpack.c.l.b16 %v1273
        %v1345 = vunpack.c.l.b16 %v1274
        %v1346 = vunpack.c.l.b16 %v1275
        %v1347 = vunpack.c.l.b16 %v1276
        %v1348 = vunpack.c.l.b16 %v1277
        %v1349 = vunpack.c.l.b16 %v1278
        %v1350 = vunpack.c.l.b16 %v1279
        %v1351 = vunpack.c.l.b16 %v1280
        %v1352 = vunpack.c.l.b16 %v1281
        %v1353 = vunpack.c.l.b16 %v1282
        %v1354 = vunpack.c.l.b16 %v1283
        %v1355 = vunpack.c.l.b16 %v1284
        %v1356 = vunpack.c.l.b16 %v1285
        %v1357 = vunpack.c.l.b16 %v1286
        %v1358 = vpack.c.b16 %v1327, %v1326
        %v1359 = vpack.c.b16 %v1329, %v1328
        %v1360 = vpack.c.b16 %v1331, %v1330
        %v1361 = vpack.c.b16 %v1333, %v1332
        %v1362 = vpack.c.b16 %v1335, %v1334
        %v1363 = vpack.c.b16 %v1337, %v1336
        %v1364 = vpack.c.b16 %v1339, %v1338
        %v1365 = vpack.c.b16 %v1341, %v1340
        %v1366 = vpack.c.b16 %v1343, %v1342
        %v1367 = vpack.c.b16 %v1345, %v1344
        %v1368 = vpack.c.b16 %v1347, %v1346
        %v1369 = vpack.c.b16 %v1349, %v1348
        %v1370 = vpack.c.b16 %v1351, %v1350
        %v1371 = vpack.c.b16 %v1353, %v1352
        %v1372 = vpack.c.b16 %v1355, %v1354
        %v1373 = vpack.c.b16 %v1357, %v1356
        %1390 = vmatprep.subr.bf16.mxu0 0
        %1391 = vmatpush1.bf16.msra.mxu0 %v1358
        %1392 = vmatprep.subr.bf16.mxu0 0
        %1393 = vmatpush1.bf16.msra.mxu0 %v1359
        %1394 = vmatprep.subr.bf16.mxu0 0
        %1395 = vmatpush1.bf16.msra.mxu0 %v1360
        %1396 = vmatprep.subr.bf16.mxu0 0
        %1397 = vmatpush1.bf16.msra.mxu0 %v1361
        %1398 = vmatprep.subr.bf16.mxu0 0
        %1399 = vmatpush1.bf16.msra.mxu0 %v1362
        %1400 = vmatprep.subr.bf16.mxu0 0
        %1401 = vmatpush1.bf16.msra.mxu0 %v1363
        %1402 = vmatprep.subr.bf16.mxu0 0
        %1403 = vmatpush1.bf16.msra.mxu0 %v1364
        %1404 = vmatprep.subr.bf16.mxu0 0
        %1405 = vmatpush1.bf16.msra.mxu0 %v1365
        %1406 = vmatprep.subr.bf16.mxu0 0
        %1407 = vmatpush1.bf16.msra.mxu0 %v1366
        %1408 = vmatprep.subr.bf16.mxu0 0
        %1409 = vmatpush1.bf16.msra.mxu0 %v1367
        %1410 = vmatprep.subr.bf16.mxu0 0
        %1411 = vmatpush1.bf16.msra.mxu0 %v1368
        %1412 = vmatprep.subr.bf16.mxu0 0
        %1413 = vmatpush1.bf16.msra.mxu0 %v1369
        %1414 = vmatprep.subr.bf16.mxu0 0
        %1415 = vmatpush1.bf16.msra.mxu0 %v1370
        %1416 = vmatprep.subr.bf16.mxu0 0
        %1417 = vmatpush1.bf16.msra.mxu0 %v1371
        %1418 = vmatprep.subr.bf16.mxu0 0
        %1419 = vmatpush1.bf16.msra.mxu0 %v1372
        %1420 = vmatprep.subr.bf16.mxu0 0
        %1421 = vmatpush1.bf16.msra.mxu0 %v1373
        %1422 = vmatprep.mubr.bf16.mxu0 %v1224
        %1423 = vmatmul.mubr.bf16.gmra.mrb[0].mxu0 %v1223
        %v1424 = vpop.f32.mrb[0].mxu0
        %v1425 = vadd.f32 %v1292, %v1424
        %v1426 = vpop.f32.mrb[0].mxu0
        %v1427 = vpop.f32.mrb[0].mxu0
        %v1428 = vadd.f32 %v1292, %v1427
        %v1429 = vpop.f32.mrb[0].mxu0
        %1430 = vmatprep.mubr.bf16.mxu0 %v1226
        %1431 = vmatmul.mubr.bf16.gmra.mrb[0].mxu0 %v1225
        %v1432 = vpop.f32.mrb[0].mxu0
        %v1433 = vadd.f32 %v1292, %v1432
        %v1434 = vpop.f32.mrb[0].mxu0
        %v1435 = vpop.f32.mrb[0].mxu0
        %v1436 = vadd.f32 %v1292, %v1435
        %v1437 = vpop.f32.mrb[0].mxu0
        %1438 = vmatprep.mubr.bf16.mxu0 %v1228
        %1439 = vmatmul.mubr.bf16.gmra.mrb[0].mxu0 %v1227
        %v1440 = vpop.f32.mrb[0].mxu0
        %v1441 = vadd.f32 %v1292, %v1440
        %v1442 = vpop.f32.mrb[0].mxu0
        %v1443 = vpop.f32.mrb[0].mxu0
        %v1444 = vadd.f32 %v1292, %v1443
        %v1445 = vpop.f32.mrb[0].mxu0
        %1446 = vmatprep.mubr.bf16.mxu0 %v1230
        %1447 = vmatmul.mubr.bf16.gmra.mrb[0].mxu0 %v1229
        %v1448 = vpop.f32.mrb[0].mxu0
        %v1449 = vadd.f32 %v1292, %v1448
        %v1450 = vpop.f32.mrb[0].mxu0
        %v1451 = vpop.f32.mrb[0].mxu0
        %v1452 = vadd.f32 %v1292, %v1451
        %v1453 = vpop.f32.mrb[0].mxu0
        %1454 = vmatprep.mubr.bf16.mxu0 %v1232
        %1455 = vmatmul.mubr.bf16.gmra.mrb[0].mxu0 %v1231
        %v1456 = vpop.f32.mrb[0].mxu0
        %v1457 = vadd.f32 %v1292, %v1456
        %v1458 = vpop.f32.mrb[0].mxu0
        %v1459 = vpop.f32.mrb[0].mxu0
        %v1460 = vadd.f32 %v1292, %v1459
        %v1461 = vpop.f32.mrb[0].mxu0
        %1462 = vmatprep.mubr.bf16.mxu0 %v1234
        %1463 = vmatmul.mubr.bf16.gmra.mrb[0].mxu0 %v1233
        %v1464 = vpop.f32.mrb[0].mxu0
        %v1465 = vadd.f32 %v1292, %v1464
        %v1466 = vpop.f32.mrb[0].mxu0
        %v1467 = vpop.f32.mrb[0].mxu0
        %v1468 = vadd.f32 %v1292, %v1467
        %v1469 = vpop.f32.mrb[0].mxu0
        %1470 = vmatprep.mubr.bf16.mxu0 %v1236
        %1471 = vmatmul.mubr.bf16.gmra.mrb[0].mxu0 %v1235
        %v1472 = vpop.f32.mrb[0].mxu0
        %v1473 = vadd.f32 %v1292, %v1472
        %v1474 = vpop.f32.mrb[0].mxu0
        %v1475 = vpop.f32.mrb[0].mxu0
        %v1476 = vadd.f32 %v1292, %v1475
        %v1477 = vpop.f32.mrb[0].mxu0
        %1478 = vmatprep.mubr.bf16.mxu0 %v1238
        %1479 = vmatmul.mubr.bf16.gmra.mrb[0].mxu0 %v1237
        %v1480 = vpop.f32.mrb[0].mxu0
        %v1481 = vadd.f32 %v1292, %v1480
        %v1482 = vpop.f32.mrb[0].mxu0
        %v1483 = vpop.f32.mrb[0].mxu0
        %v1484 = vadd.f32 %v1292, %v1483
        %v1485 = vpop.f32.mrb[0].mxu0
        %1486 = vmatprep.mubr.bf16.mxu0 %v1240
        %1487 = vmatmul.mubr.bf16.gmra.mrb[0].mxu0 %v1239
        %v1488 = vpop.f32.mrb[0].mxu0
        %v1489 = vadd.f32 %v1292, %v1488
        %v1490 = vpop.f32.mrb[0].mxu0
        %v1491 = vpop.f32.mrb[0].mxu0
        %v1492 = vadd.f32 %v1292, %v1491
        %v1493 = vpop.f32.mrb[0].mxu0
        %1494 = vmatprep.mubr.bf16.mxu0 %v1242
        %1495 = vmatmul.mubr.bf16.gmra.mrb[0].mxu0 %v1241
        %v1496 = vpop.f32.mrb[0].mxu0
        %v1497 = vadd.f32 %v1292, %v1496
        %v1498 = vpop.f32.mrb[0].mxu0
        %v1499 = vpop.f32.mrb[0].mxu0
        %v1500 = vadd.f32 %v1292, %v1499
        %v1501 = vpop.f32.mrb[0].mxu0
        %1502 = vmatprep.mubr.bf16.mxu0 %v1244
        %1503 = vmatmul.mubr.bf16.gmra.mrb[0].mxu0 %v1243
        %v1504 = vpop.f32.mrb[0].mxu0
        %v1505 = vadd.f32 %v1292, %v1504
        %v1506 = vpop.f32.mrb[0].mxu0
        %v1507 = vpop.f32.mrb[0].mxu0
        %v1508 = vadd.f32 %v1292, %v1507
        %v1509 = vpop.f32.mrb[0].mxu0
        %1510 = vmatprep.mubr.bf16.mxu0 %v1246
        %1511 = vmatmul.mubr.bf16.gmra.mrb[0].mxu0 %v1245
        %v1512 = vpop.f32.mrb[0].mxu0
        %v1513 = vadd.f32 %v1292, %v1512
        %v1514 = vpop.f32.mrb[0].mxu0
        %v1515 = vpop.f32.mrb[0].mxu0
        %v1516 = vadd.f32 %v1292, %v1515
        %v1517 = vpop.f32.mrb[0].mxu0
        %1518 = vmatprep.mubr.bf16.mxu0 %v1248
        %1519 = vmatmul.mubr.bf16.gmra.mrb[0].mxu0 %v1247
        %v1520 = vpop.f32.mrb[0].mxu0
        %v1521 = vadd.f32 %v1292, %v1520
        %v1522 = vpop.f32.mrb[0].mxu0
        %v1523 = vpop.f32.mrb[0].mxu0
        %v1524 = vadd.f32 %v1292, %v1523
        %v1525 = vpop.f32.mrb[0].mxu0
        %1526 = vmatprep.mubr.bf16.mxu0 %v1250
        %1527 = vmatmul.mubr.bf16.gmra.mrb[0].mxu0 %v1249
        %v1528 = vpop.f32.mrb[0].mxu0
        %v1529 = vadd.f32 %v1292, %v1528
        %v1530 = vpop.f32.mrb[0].mxu0
        %v1531 = vpop.f32.mrb[0].mxu0
        %v1532 = vadd.f32 %v1292, %v1531
        %v1533 = vpop.f32.mrb[0].mxu0
        %1534 = vmatprep.mubr.bf16.mxu0 %v1252
        %1535 = vmatmul.mubr.bf16.gmra.mrb[0].mxu0 %v1251
        %v1536 = vpop.f32.mrb[0].mxu0
        %v1537 = vadd.f32 %v1292, %v1536
        %v1538 = vpop.f32.mrb[0].mxu0
        %v1539 = vpop.f32.mrb[0].mxu0
        %v1540 = vadd.f32 %v1292, %v1539
        %v1541 = vpop.f32.mrb[0].mxu0
        %1542 = vmatprep.mubr.bf16.mxu0 %v1254
        %1543 = vmatmul.mubr.bf16.gmra.mrb[0].mxu0 %v1253
        %v1544 = vpop.f32.mrb[0].mxu0
        %v1545 = vadd.f32 %v1292, %v1544
        %v1546 = vpop.f32.mrb[0].mxu0
        %v1547 = vpop.f32.mrb[0].mxu0
        %v1548 = vadd.f32 %v1292, %v1547
        %v1549 = vpop.f32.mrb[0].mxu0
        %1550 = vdwg.mxu0
        %v1551 = vmul.f32 %v1425, 0.5
        %v1552 = vmul.f32 %v1428, 0.5
        %v1553 = vmul.f32 %v1433, 0.5
        %v1554 = vmul.f32 %v1436, 0.5
        %v1555 = vmul.f32 %v1441, 0.5
        %v1556 = vmul.f32 %v1444, 0.5
        %v1557 = vmul.f32 %v1449, 0.5
        %v1558 = vmul.f32 %v1452, 0.5
        %v1559 = vmul.f32 %v1457, 0.5
        %v1560 = vmul.f32 %v1460, 0.5
        %v1561 = vmul.f32 %v1465, 0.5
        %v1562 = vmul.f32 %v1468, 0.5
        %v1563 = vmul.f32 %v1473, 0.5
        %v1564 = vmul.f32 %v1476, 0.5
        %v1565 = vmul.f32 %v1481, 0.5
        %v1566 = vmul.f32 %v1484, 0.5
        %v1567 = vmul.f32 %v1489, 0.5
        %v1568 = vmul.f32 %v1492, 0.5
        %v1569 = vmul.f32 %v1497, 0.5
        %v1570 = vmul.f32 %v1500, 0.5
        %v1571 = vmul.f32 %v1505, 0.5
        %v1572 = vmul.f32 %v1508, 0.5
        %v1573 = vmul.f32 %v1513, 0.5
        %v1574 = vmul.f32 %v1516, 0.5
        %v1575 = vmul.f32 %v1521, 0.5
        %v1576 = vmul.f32 %v1524, 0.5
        %v1577 = vmul.f32 %v1529, 0.5
        %v1578 = vmul.f32 %v1532, 0.5
        %v1579 = vmul.f32 %v1537, 0.5
        %v1580 = vmul.f32 %v1540, 0.5
        %v1581 = vmul.f32 %v1545, 0.5
        %v1582 = vmul.f32 %v1548, 0.5
        %v1583 = vmul.f32 %v1551, 1.442695
        %v1584 = vpow.pop %v1583
        %v1585 = vmul.f32 %v1552, 1.442695
        %v1586 = vpow.pop %v1585
        %v1587 = vmul.f32 %v1553, 1.442695
        %v1588 = vpow.pop %v1587
        %v1589 = vmul.f32 %v1554, 1.442695
        %v1590 = vpow.pop %v1589
        %v1591 = vmul.f32 %v1555, 1.442695
        %v1592 = vpow.pop %v1591
        %v1593 = vmul.f32 %v1556, 1.442695
        %v1594 = vpow.pop %v1593
        %v1595 = vmul.f32 %v1557, 1.442695
        %v1596 = vpow.pop %v1595
        %v1597 = vmul.f32 %v1558, 1.442695
        %v1598 = vpow.pop %v1597
        %v1599 = vmul.f32 %v1559, 1.442695
        %v1600 = vpow.pop %v1599
        %v1601 = vmul.f32 %v1560, 1.442695
        %v1602 = vpow.pop %v1601
        %v1603 = vmul.f32 %v1561, 1.442695
        %v1604 = vpow.pop %v1603
        %v1605 = vmul.f32 %v1562, 1.442695
        %v1606 = vpow.pop %v1605
        %v1607 = vmul.f32 %v1563, 1.442695
        %v1608 = vpow.pop %v1607
        %v1609 = vmul.f32 %v1564, 1.442695
        %v1610 = vpow.pop %v1609
        %v1611 = vmul.f32 %v1565, 1.442695
        %v1612 = vpow.pop %v1611
        %v1613 = vmul.f32 %v1566, 1.442695
        %v1614 = vpow.pop %v1613
        %v1615 = vmul.f32 %v1567, 1.442695
        %v1616 = vpow.pop %v1615
        %v1617 = vmul.f32 %v1568, 1.442695
        %v1618 = vpow.pop %v1617
        %v1619 = vmul.f32 %v1569, 1.442695
        %v1620 = vpow.pop %v1619
        %v1621 = vmul.f32 %v1570, 1.442695
        %v1622 = vpow.pop %v1621
        %v1623 = vmul.f32 %v1571, 1.442695
        %v1624 = vpow.pop %v1623
        %v1625 = vmul.f32 %v1572, 1.442695
        %v1626 = vpow.pop %v1625
        %v1627 = vmul.f32 %v1573, 1.442695
        %v1628 = vpow.pop %v1627
        %v1629 = vmul.f32 %v1574, 1.442695
        %v1630 = vpow.pop %v1629
        %v1631 = vmul.f32 %v1575, 1.442695
        %v1632 = vpow.pop %v1631
        %v1633 = vmul.f32 %v1576, 1.442695
        %v1634 = vpow.pop %v1633
        %v1635 = vmul.f32 %v1577, 1.442695
        %v1636 = vpow.pop %v1635
        %v1637 = vmul.f32 %v1578, 1.442695
        %v1638 = vpow.pop %v1637
        %v1639 = vmul.f32 %v1579, 1.442695
        %v1640 = vpow.pop %v1639
        %v1641 = vmul.f32 %v1580, 1.442695
        %v1642 = vpow.pop %v1641
        %v1643 = vmul.f32 %v1581, 1.442695
        %v1644 = vpow.pop %v1643
        %v1645 = vmul.f32 %v1582, 1.442695
        %v1646 = vpow.pop %v1645
        %v1647 = vld [vmem:[%s484] sm:$0xff]
        %v1648 = vld [vmem:[%s484 + $0x8] sm:$0xff]
        %v1649 = vld [vmem:[%s484 + $0x10] sm:$0xff]
        %v1650 = vld [vmem:[%s484 + $0x18] sm:$0xff]
        %v1651 = vld [vmem:[%s484 + $0x20] sm:$0xff]
        %v1652 = vld [vmem:[%s484 + $0x28] sm:$0xff]
        %v1653 = vld [vmem:[%s484 + $0x30] sm:$0xff]
        %v1654 = vld [vmem:[%s484 + $0x38] sm:$0xff]
        %v1655 = vld [vmem:[%s484 + $0x40] sm:$0xff]
        %v1656 = vld [vmem:[%s484 + $0x48] sm:$0xff]
        %v1657 = vld [vmem:[%s484 + $0x50] sm:$0xff]
        %v1658 = vld [vmem:[%s484 + $0x58] sm:$0xff]
        %v1659 = vld [vmem:[%s484 + $0x60] sm:$0xff]
        %v1660 = vld [vmem:[%s484 + $0x68] sm:$0xff]
        %v1661 = vld [vmem:[%s484 + $0x70] sm:$0xff]
        %v1662 = vld [vmem:[%s484 + $0x78] sm:$0xff]
        %v1663 = vld [vmem:[%s484 + $0x80] sm:$0xff]
        %v1664 = vld [vmem:[%s484 + $0x88] sm:$0xff]
        %v1665 = vld [vmem:[%s484 + $0x90] sm:$0xff]
        %v1666 = vld [vmem:[%s484 + $0x98] sm:$0xff]
        %v1667 = vld [vmem:[%s484 + $0xa0] sm:$0xff]
        %v1668 = vld [vmem:[%s484 + $0xa8] sm:$0xff]
        %v1669 = vld [vmem:[%s484 + $0xb0] sm:$0xff]
        %v1670 = vld [vmem:[%s484 + $0xb8] sm:$0xff]
        %v1671 = vld [vmem:[%s484 + $0xc0] sm:$0xff]
        %v1672 = vld [vmem:[%s484 + $0xc8] sm:$0xff]
        %v1673 = vld [vmem:[%s484 + $0xd0] sm:$0xff]
        %v1674 = vld [vmem:[%s484 + $0xd8] sm:$0xff]
        %v1675 = vld [vmem:[%s484 + $0xe0] sm:$0xff]
        %v1676 = vld [vmem:[%s484 + $0xe8] sm:$0xff]
        %v1677 = vld [vmem:[%s484 + $0xf0] sm:$0xff]
        %v1678 = vld [vmem:[%s484 + $0xf8] sm:$0xff]
        %1711 = vrot.lane.b32.xlu0 %v1584, 112
        %v1712 = vpop.permute.xlu0 %1711
        %1713 = vrot.lane.b32.xlu0 %v1586, 112
        %v1714 = vpop.permute.xlu0 %1713
        %1715 = vrot.lane.b32.xlu0 %v1588, 112
        %v1716 = vpop.permute.xlu0 %1715
        %1717 = vrot.lane.b32.xlu0 %v1590, 112
        %v1718 = vpop.permute.xlu0 %1717
        %1719 = vrot.lane.b32.xlu0 %v1592, 112
        %v1720 = vpop.permute.xlu0 %1719
        %1721 = vrot.lane.b32.xlu0 %v1594, 112
        %v1722 = vpop.permute.xlu0 %1721
        %1723 = vrot.lane.b32.xlu0 %v1596, 112
        %v1724 = vpop.permute.xlu0 %1723
        %1725 = vrot.lane.b32.xlu0 %v1598, 112
        %v1726 = vpop.permute.xlu0 %1725
        %1727 = vrot.lane.b32.xlu0 %v1600, 112
        %v1728 = vpop.permute.xlu0 %1727
        %1729 = vrot.lane.b32.xlu0 %v1602, 112
        %v1730 = vpop.permute.xlu0 %1729
        %1731 = vrot.lane.b32.xlu0 %v1604, 112
        %v1732 = vpop.permute.xlu0 %1731
        %1733 = vrot.lane.b32.xlu0 %v1606, 112
        %v1734 = vpop.permute.xlu0 %1733
        %1735 = vrot.lane.b32.xlu0 %v1608, 112
        %v1736 = vpop.permute.xlu0 %1735
        %1737 = vrot.lane.b32.xlu0 %v1610, 112
        %v1738 = vpop.permute.xlu0 %1737
        %1739 = vrot.lane.b32.xlu0 %v1612, 112
        %v1740 = vpop.permute.xlu0 %1739
        %1741 = vrot.lane.b32.xlu0 %v1614, 112
        %v1742 = vpop.permute.xlu0 %1741
        %1743 = vrot.lane.b32.xlu0 %v1616, 112
        %v1744 = vpop.permute.xlu0 %1743
        %1745 = vrot.lane.b32.xlu0 %v1618, 112
        %v1746 = vpop.permute.xlu0 %1745
        %1747 = vrot.lane.b32.xlu0 %v1620, 112
        %v1748 = vpop.permute.xlu0 %1747
        %1749 = vrot.lane.b32.xlu0 %v1622, 112
        %v1750 = vpop.permute.xlu0 %1749
        %1751 = vrot.lane.b32.xlu0 %v1624, 112
        %v1752 = vpop.permute.xlu0 %1751
        %1753 = vrot.lane.b32.xlu0 %v1626, 112
        %v1754 = vpop.permute.xlu0 %1753
        %1755 = vrot.lane.b32.xlu0 %v1628, 112
        %v1756 = vpop.permute.xlu0 %1755
        %1757 = vrot.lane.b32.xlu0 %v1630, 112
        %v1758 = vpop.permute.xlu0 %1757
        %1759 = vrot.lane.b32.xlu0 %v1632, 112
        %v1760 = vpop.permute.xlu0 %1759
        %1761 = vrot.lane.b32.xlu0 %v1634, 112
        %v1762 = vpop.permute.xlu0 %1761
        %1763 = vrot.lane.b32.xlu0 %v1636, 112
        %v1764 = vpop.permute.xlu0 %1763
        %1765 = vrot.lane.b32.xlu0 %v1638, 112
        %v1766 = vpop.permute.xlu0 %1765
        %1767 = vrot.lane.b32.xlu0 %v1640, 112
        %v1768 = vpop.permute.xlu0 %1767
        %1769 = vrot.lane.b32.xlu0 %v1642, 112
        %v1770 = vpop.permute.xlu0 %1769
        %1771 = vrot.lane.b32.xlu0 %v1644, 112
        %v1772 = vpop.permute.xlu0 %1771
        %1773 = vrot.lane.b32.xlu0 %v1646, 112
        %v1774 = vpop.permute.xlu0 %1773
        %v1807 = vmul.f32 %v1647, %v1712
        %v1808 = vmul.f32 %v1648, %v1714
        %v1809 = vmul.f32 %v1649, %v1716
        %v1810 = vmul.f32 %v1650, %v1718
        %v1811 = vmul.f32 %v1651, %v1720
        %v1812 = vmul.f32 %v1652, %v1722
        %v1813 = vmul.f32 %v1653, %v1724
        %v1814 = vmul.f32 %v1654, %v1726
        %v1815 = vmul.f32 %v1655, %v1728
        %v1816 = vmul.f32 %v1656, %v1730
        %v1817 = vmul.f32 %v1657, %v1732
        %v1818 = vmul.f32 %v1658, %v1734
        %v1819 = vmul.f32 %v1659, %v1736
        %v1820 = vmul.f32 %v1660, %v1738
        %v1821 = vmul.f32 %v1661, %v1740
        %v1822 = vmul.f32 %v1662, %v1742
        %v1823 = vmul.f32 %v1663, %v1744
        %v1824 = vmul.f32 %v1664, %v1746
        %v1825 = vmul.f32 %v1665, %v1748
        %v1826 = vmul.f32 %v1666, %v1750
        %v1827 = vmul.f32 %v1667, %v1752
        %v1828 = vmul.f32 %v1668, %v1754
        %v1829 = vmul.f32 %v1669, %v1756
        %v1830 = vmul.f32 %v1670, %v1758
        %v1831 = vmul.f32 %v1671, %v1760
        %v1832 = vmul.f32 %v1672, %v1762
        %v1833 = vmul.f32 %v1673, %v1764
        %v1834 = vmul.f32 %v1674, %v1766
        %v1835 = vmul.f32 %v1675, %v1768
        %v1836 = vmul.f32 %v1676, %v1770
        %v1837 = vmul.f32 %v1677, %v1772
        %v1838 = vmul.f32 %v1678, %v1774
        %v1839 = vadd.f32 %v1807, %v1425
        %v1840 = vadd.f32 %v1808, %v1428
        %v1841 = vadd.f32 %v1809, %v1433
        %v1842 = vadd.f32 %v1810, %v1436
        %v1843 = vadd.f32 %v1811, %v1441
        %v1844 = vadd.f32 %v1812, %v1444
        %v1845 = vadd.f32 %v1813, %v1449
        %v1846 = vadd.f32 %v1814, %v1452
        %v1847 = vadd.f32 %v1815, %v1457
        %v1848 = vadd.f32 %v1816, %v1460
        %v1849 = vadd.f32 %v1817, %v1465
        %v1850 = vadd.f32 %v1818, %v1468
        %v1851 = vadd.f32 %v1819, %v1473
        %v1852 = vadd.f32 %v1820, %v1476
        %v1853 = vadd.f32 %v1821, %v1481
        %v1854 = vadd.f32 %v1822, %v1484
        %v1855 = vadd.f32 %v1823, %v1489
        %v1856 = vadd.f32 %v1824, %v1492
        %v1857 = vadd.f32 %v1825, %v1497
        %v1858 = vadd.f32 %v1826, %v1500
        %v1859 = vadd.f32 %v1827, %v1505
        %v1860 = vadd.f32 %v1828, %v1508
        %v1861 = vadd.f32 %v1829, %v1513
        %v1862 = vadd.f32 %v1830, %v1516
        %v1863 = vadd.f32 %v1831, %v1521
        %v1864 = vadd.f32 %v1832, %v1524
        %v1865 = vadd.f32 %v1833, %v1529
        %v1866 = vadd.f32 %v1834, %v1532
        %v1867 = vadd.f32 %v1835, %v1537
        %v1868 = vadd.f32 %v1836, %v1540
        %v1869 = vadd.f32 %v1837, %v1545
        %v1870 = vadd.f32 %v1838, %v1548
        %v1871 = vpack.c.bf16 %v1840, %v1839
        %v1872 = vpack.c.bf16 %v1842, %v1841
        %v1873 = vpack.c.bf16 %v1844, %v1843
        %v1874 = vpack.c.bf16 %v1846, %v1845
        %v1875 = vpack.c.bf16 %v1848, %v1847
        %v1876 = vpack.c.bf16 %v1850, %v1849
        %v1877 = vpack.c.bf16 %v1852, %v1851
        %v1878 = vpack.c.bf16 %v1854, %v1853
        %v1879 = vpack.c.bf16 %v1856, %v1855
        %v1880 = vpack.c.bf16 %v1858, %v1857
        %v1881 = vpack.c.bf16 %v1860, %v1859
        %v1882 = vpack.c.bf16 %v1862, %v1861
        %v1883 = vpack.c.bf16 %v1864, %v1863
        %v1884 = vpack.c.bf16 %v1866, %v1865
        %v1885 = vpack.c.bf16 %v1868, %v1867
        %v1886 = vpack.c.bf16 %v1870, %v1869
        %v1887 = vld [vmem:[#allocation13] sm:$0xff]
        %v1888 = vld [vmem:[#allocation13 + $0x8] sm:$0xff]
        %v1889 = vld [vmem:[#allocation14] sm:$0x3]
        %v1891 = vlaneseq
        %v1892 = vshrl.u32 %v1891, 7
        %v1893 = vsub.s32 0, %v1892
        %v1894 = vrot.slane %v1889, %v1893
        %v1895 = vlaneseq
        %v1896 = vshrl.u32 %v1895, 7
        %v1897 = vsub.s32 1, %v1896
        %v1898 = vrot.slane %v1889, %v1897
        %v1903 = vunpack.c.l.b16 %v1887
        %v1904 = vunpack.c.h.b16 %v1887
        %v1905 = vunpack.c.l.b16 %v1888
        %v1906 = vunpack.c.h.b16 %v1888
        %v1907 = vpack.c.b16 %v1905, %v1903
        %v1908 = vpack.c.b16 %v1906, %v1904
        %vm1911 = vcmask 130048
        %v1913 = vsel %vm1911, %v1871, 0
        %v1916 = vsel %vm1911, %v1872, 0
        %v1919 = vsel %vm1911, %v1873, 0
        %v1922 = vsel %vm1911, %v1874, 0
        %v1925 = vsel %vm1911, %v1875, 0
        %v1928 = vsel %vm1911, %v1876, 0
        %v1931 = vsel %vm1911, %v1877, 0
        %v1934 = vsel %vm1911, %v1878, 0
        %v1937 = vsel %vm1911, %v1879, 0
        %v1940 = vsel %vm1911, %v1880, 0
        %v1943 = vsel %vm1911, %v1881, 0
        %v1946 = vsel %vm1911, %v1882, 0
        %v1949 = vsel %vm1911, %v1883, 0
        %v1952 = vsel %vm1911, %v1884, 0
        %v1955 = vsel %vm1911, %v1885, 0
        %v1958 = vsel %vm1911, %v1886, 0
        %1960 = vmatprep.subr.bf16.mxu0 %v1908
        %1961 = vmatpush1.bf16.msra.mxu0 %v1907
        %1962 = vmatprep.subr.bf16.mxu0 0
        %1963 = vmatpush1.bf16.msra.mxu0 0
        %1964 = vmatprep.subr.bf16.mxu0 0
        %1965 = vmatpush1.bf16.msra.mxu0 0
        %1966 = vmatprep.subr.bf16.mxu0 0
        %1967 = vmatpush1.bf16.msra.mxu0 0
        %1968 = vmatprep.subr.bf16.mxu0 0
        %1969 = vmatpush1.bf16.msra.mxu0 0
        %1970 = vmatprep.subr.bf16.mxu0 0
        %1971 = vmatpush1.bf16.msra.mxu0 0
        %1972 = vmatprep.subr.bf16.mxu0 0
        %1973 = vmatpush1.bf16.msra.mxu0 0
        %1974 = vmatprep.subr.bf16.mxu0 0
        %1975 = vmatpush1.bf16.msra.mxu0 0
        %1976 = vmatprep.subr.bf16.mxu0 0
        %1977 = vmatpush1.bf16.msra.mxu0 0
        %1978 = vmatprep.subr.bf16.mxu0 0
        %1979 = vmatpush1.bf16.msra.mxu0 0
        %1980 = vmatprep.subr.bf16.mxu0 0
        %1981 = vmatpush1.bf16.msra.mxu0 0
        %1982 = vmatprep.subr.bf16.mxu0 0
        %1983 = vmatpush1.bf16.msra.mxu0 0
        %1984 = vmatprep.subr.bf16.mxu0 0
        %1985 = vmatpush1.bf16.msra.mxu0 0
        %1986 = vmatprep.subr.bf16.mxu0 0
        %1987 = vmatpush1.bf16.msra.mxu0 0
        %1988 = vmatprep.subr.bf16.mxu0 0
        %1989 = vmatpush1.bf16.msra.mxu0 0
        %1990 = vmatprep.subr.bf16.mxu0 0
        %1991 = vmatpush1.bf16.msra.mxu0 0
        %1992 = vmatprep.mubr.bf16.mxu0 0
        %1993 = vmatmul.mubr.bf16.gmra.mrb[0].mxu0 %v1913
        %v1994 = vpop.f32.mrb[0].mxu0
        %v1995 = vadd.f32 %v1894, %v1994
        %v1996 = vpop.f32.mrb[0].mxu0
        %v1997 = vadd.f32 %v1898, %v1996
        %v1998 = vpop.f32.mrb[0].mxu0
        %v1999 = vadd.f32 %v1894, %v1998
        %v2000 = vpop.f32.mrb[0].mxu0
        %v2001 = vadd.f32 %v1898, %v2000
        %2002 = vmatprep.mubr.bf16.mxu0 0
        %2003 = vmatmul.mubr.bf16.gmra.mrb[0].mxu0 %v1916
        %v2004 = vpop.f32.mrb[0].mxu0
        %v2005 = vadd.f32 %v1894, %v2004
        %v2006 = vpop.f32.mrb[0].mxu0
        %v2007 = vadd.f32 %v1898, %v2006
        %v2008 = vpop.f32.mrb[0].mxu0
        %v2009 = vadd.f32 %v1894, %v2008
        %v2010 = vpop.f32.mrb[0].mxu0
        %v2011 = vadd.f32 %v1898, %v2010
        %2012 = vmatprep.mubr.bf16.mxu0 0
        %2013 = vmatmul.mubr.bf16.gmra.mrb[0].mxu0 %v1919
        %v2014 = vpop.f32.mrb[0].mxu0
        %v2015 = vadd.f32 %v1894, %v2014
        %v2016 = vpop.f32.mrb[0].mxu0
        %v2017 = vadd.f32 %v1898, %v2016
        %v2018 = vpop.f32.mrb[0].mxu0
        %v2019 = vadd.f32 %v1894, %v2018
        %v2020 = vpop.f32.mrb[0].mxu0
        %v2021 = vadd.f32 %v1898, %v2020
        %2022 = vmatprep.mubr.bf16.mxu0 0
        %2023 = vmatmul.mubr.bf16.gmra.mrb[0].mxu0 %v1922
        %v2024 = vpop.f32.mrb[0].mxu0
        %v2025 = vadd.f32 %v1894, %v2024
        %v2026 = vpop.f32.mrb[0].mxu0
        %v2027 = vadd.f32 %v1898, %v2026
        %v2028 = vpop.f32.mrb[0].mxu0
        %v2029 = vadd.f32 %v1894, %v2028
        %v2030 = vpop.f32.mrb[0].mxu0
        %v2031 = vadd.f32 %v1898, %v2030
        %2032 = vmatprep.mubr.bf16.mxu0 0
        %2033 = vmatmul.mubr.bf16.gmra.mrb[0].mxu0 %v1925
        %v2034 = vpop.f32.mrb[0].mxu0
        %v2035 = vadd.f32 %v1894, %v2034
        %v2036 = vpop.f32.mrb[0].mxu0
        %v2037 = vadd.f32 %v1898, %v2036
        %v2038 = vpop.f32.mrb[0].mxu0
        %v2039 = vadd.f32 %v1894, %v2038
        %v2040 = vpop.f32.mrb[0].mxu0
        %v2041 = vadd.f32 %v1898, %v2040
        %2042 = vmatprep.mubr.bf16.mxu0 0
        %2043 = vmatmul.mubr.bf16.gmra.mrb[0].mxu0 %v1928
        %v2044 = vpop.f32.mrb[0].mxu0
        %v2045 = vadd.f32 %v1894, %v2044
        %v2046 = vpop.f32.mrb[0].mxu0
        %v2047 = vadd.f32 %v1898, %v2046
        %v2048 = vpop.f32.mrb[0].mxu0
        %v2049 = vadd.f32 %v1894, %v2048
        %v2050 = vpop.f32.mrb[0].mxu0
        %v2051 = vadd.f32 %v1898, %v2050
        %2052 = vmatprep.mubr.bf16.mxu0 0
        %2053 = vmatmul.mubr.bf16.gmra.mrb[0].mxu0 %v1931
        %v2054 = vpop.f32.mrb[0].mxu0
        %v2055 = vadd.f32 %v1894, %v2054
        %v2056 = vpop.f32.mrb[0].mxu0
        %v2057 = vadd.f32 %v1898, %v2056
        %v2058 = vpop.f32.mrb[0].mxu0
        %v2059 = vadd.f32 %v1894, %v2058
        %v2060 = vpop.f32.mrb[0].mxu0
        %v2061 = vadd.f32 %v1898, %v2060
        %2062 = vmatprep.mubr.bf16.mxu0 0
        %2063 = vmatmul.mubr.bf16.gmra.mrb[0].mxu0 %v1934
        %v2064 = vpop.f32.mrb[0].mxu0
        %v2065 = vadd.f32 %v1894, %v2064
        %v2066 = vpop.f32.mrb[0].mxu0
        %v2067 = vadd.f32 %v1898, %v2066
        %v2068 = vpop.f32.mrb[0].mxu0
        %v2069 = vadd.f32 %v1894, %v2068
        %v2070 = vpop.f32.mrb[0].mxu0
        %v2071 = vadd.f32 %v1898, %v2070
        %2072 = vmatprep.mubr.bf16.mxu0 0
        %2073 = vmatmul.mubr.bf16.gmra.mrb[0].mxu0 %v1937
        %v2074 = vpop.f32.mrb[0].mxu0
        %v2075 = vadd.f32 %v1894, %v2074
        %v2076 = vpop.f32.mrb[0].mxu0
        %v2077 = vadd.f32 %v1898, %v2076
        %v2078 = vpop.f32.mrb[0].mxu0
        %v2079 = vadd.f32 %v1894, %v2078
        %v2080 = vpop.f32.mrb[0].mxu0
        %v2081 = vadd.f32 %v1898, %v2080
        %2082 = vmatprep.mubr.bf16.mxu0 0
        %2083 = vmatmul.mubr.bf16.gmra.mrb[0].mxu0 %v1940
        %v2084 = vpop.f32.mrb[0].mxu0
        %v2085 = vadd.f32 %v1894, %v2084
        %v2086 = vpop.f32.mrb[0].mxu0
        %v2087 = vadd.f32 %v1898, %v2086
        %v2088 = vpop.f32.mrb[0].mxu0
        %v2089 = vadd.f32 %v1894, %v2088
        %v2090 = vpop.f32.mrb[0].mxu0
        %v2091 = vadd.f32 %v1898, %v2090
        %2092 = vmatprep.mubr.bf16.mxu0 0
        %2093 = vmatmul.mubr.bf16.gmra.mrb[0].mxu0 %v1943
        %v2094 = vpop.f32.mrb[0].mxu0
        %v2095 = vadd.f32 %v1894, %v2094
        %v2096 = vpop.f32.mrb[0].mxu0
        %v2097 = vadd.f32 %v1898, %v2096
        %v2098 = vpop.f32.mrb[0].mxu0
        %v2099 = vadd.f32 %v1894, %v2098
        %v2100 = vpop.f32.mrb[0].mxu0
        %v2101 = vadd.f32 %v1898, %v2100
        %2102 = vmatprep.mubr.bf16.mxu0 0
        %2103 = vmatmul.mubr.bf16.gmra.mrb[0].mxu0 %v1946
        %v2104 = vpop.f32.mrb[0].mxu0
        %v2105 = vadd.f32 %v1894, %v2104
        %v2106 = vpop.f32.mrb[0].mxu0
        %v2107 = vadd.f32 %v1898, %v2106
        %v2108 = vpop.f32.mrb[0].mxu0
        %v2109 = vadd.f32 %v1894, %v2108
        %v2110 = vpop.f32.mrb[0].mxu0
        %v2111 = vadd.f32 %v1898, %v2110
        %2112 = vmatprep.mubr.bf16.mxu0 0
        %2113 = vmatmul.mubr.bf16.gmra.mrb[0].mxu0 %v1949
        %v2114 = vpop.f32.mrb[0].mxu0
        %v2115 = vadd.f32 %v1894, %v2114
        %v2116 = vpop.f32.mrb[0].mxu0
        %v2117 = vadd.f32 %v1898, %v2116
        %v2118 = vpop.f32.mrb[0].mxu0
        %v2119 = vadd.f32 %v1894, %v2118
        %v2120 = vpop.f32.mrb[0].mxu0
        %v2121 = vadd.f32 %v1898, %v2120
        %2122 = vmatprep.mubr.bf16.mxu0 0
        %2123 = vmatmul.mubr.bf16.gmra.mrb[0].mxu0 %v1952
        %v2124 = vpop.f32.mrb[0].mxu0
        %v2125 = vadd.f32 %v1894, %v2124
        %v2126 = vpop.f32.mrb[0].mxu0
        %v2127 = vadd.f32 %v1898, %v2126
        %v2128 = vpop.f32.mrb[0].mxu0
        %v2129 = vadd.f32 %v1894, %v2128
        %v2130 = vpop.f32.mrb[0].mxu0
        %v2131 = vadd.f32 %v1898, %v2130
        %2132 = vmatprep.mubr.bf16.mxu0 0
        %2133 = vmatmul.mubr.bf16.gmra.mrb[0].mxu0 %v1955
        %v2134 = vpop.f32.mrb[0].mxu0
        %v2135 = vadd.f32 %v1894, %v2134
        %v2136 = vpop.f32.mrb[0].mxu0
        %v2137 = vadd.f32 %v1898, %v2136
        %v2138 = vpop.f32.mrb[0].mxu0
        %v2139 = vadd.f32 %v1894, %v2138
        %v2140 = vpop.f32.mrb[0].mxu0
        %v2141 = vadd.f32 %v1898, %v2140
        %2142 = vmatprep.mubr.bf16.mxu0 0
        %2143 = vmatmul.mubr.bf16.gmra.mrb[0].mxu0 %v1958
        %v2144 = vpop.f32.mrb[0].mxu0
        %v2145 = vadd.f32 %v1894, %v2144
        %v2146 = vpop.f32.mrb[0].mxu0
        %v2147 = vadd.f32 %v1898, %v2146
        %v2148 = vpop.f32.mrb[0].mxu0
        %v2149 = vadd.f32 %v1894, %v2148
        %v2150 = vpop.f32.mrb[0].mxu0
        %v2151 = vadd.f32 %v1898, %v2150
        %2152 = vdwg.mxu0
        %v2153 = vmax.f32 %v1995, 0.0
        %v2154 = vmax.f32 %v1997, 0.0
        %v2155 = vmax.f32 %v1999, 0.0
        %v2156 = vmax.f32 %v2001, 0.0
        %v2157 = vmax.f32 %v2005, 0.0
        %v2158 = vmax.f32 %v2007, 0.0
        %v2159 = vmax.f32 %v2009, 0.0
        %v2160 = vmax.f32 %v2011, 0.0
        %v2161 = vmax.f32 %v2015, 0.0
        %v2162 = vmax.f32 %v2017, 0.0
        %v2163 = vmax.f32 %v2019, 0.0
        %v2164 = vmax.f32 %v2021, 0.0
        %v2165 = vmax.f32 %v2025, 0.0
        %v2166 = vmax.f32 %v2027, 0.0
        %v2167 = vmax.f32 %v2029, 0.0
        %v2168 = vmax.f32 %v2031, 0.0
        %v2169 = vmax.f32 %v2035, 0.0
        %v2170 = vmax.f32 %v2037, 0.0
        %v2171 = vmax.f32 %v2039, 0.0
        %v2172 = vmax.f32 %v2041, 0.0
        %v2173 = vmax.f32 %v2045, 0.0
        %v2174 = vmax.f32 %v2047, 0.0
        %v2175 = vmax.f32 %v2049, 0.0
        %v2176 = vmax.f32 %v2051, 0.0
        %v2177 = vmax.f32 %v2055, 0.0
        %v2178 = vmax.f32 %v2057, 0.0
        %v2179 = vmax.f32 %v2059, 0.0
        %v2180 = vmax.f32 %v2061, 0.0
        %v2181 = vmax.f32 %v2065, 0.0
        %v2182 = vmax.f32 %v2067, 0.0
        %v2183 = vmax.f32 %v2069, 0.0
        %v2184 = vmax.f32 %v2071, 0.0
        %v2185 = vmax.f32 %v2075, 0.0
        %v2186 = vmax.f32 %v2077, 0.0
        %v2187 = vmax.f32 %v2079, 0.0
        %v2188 = vmax.f32 %v2081, 0.0
        %v2189 = vmax.f32 %v2085, 0.0
        %v2190 = vmax.f32 %v2087, 0.0
        %v2191 = vmax.f32 %v2089, 0.0
        %v2192 = vmax.f32 %v2091, 0.0
        %v2193 = vmax.f32 %v2095, 0.0
        %v2194 = vmax.f32 %v2097, 0.0
        %v2195 = vmax.f32 %v2099, 0.0
        %v2196 = vmax.f32 %v2101, 0.0
        %v2197 = vmax.f32 %v2105, 0.0
        %v2198 = vmax.f32 %v2107, 0.0
        %v2199 = vmax.f32 %v2109, 0.0
        %v2200 = vmax.f32 %v2111, 0.0
        %v2201 = vmax.f32 %v2115, 0.0
        %v2202 = vmax.f32 %v2117, 0.0
        %v2203 = vmax.f32 %v2119, 0.0
        %v2204 = vmax.f32 %v2121, 0.0
        %v2205 = vmax.f32 %v2125, 0.0
        %v2206 = vmax.f32 %v2127, 0.0
        %v2207 = vmax.f32 %v2129, 0.0
        %v2208 = vmax.f32 %v2131, 0.0
        %v2209 = vmax.f32 %v2135, 0.0
        %v2210 = vmax.f32 %v2137, 0.0
        %v2211 = vmax.f32 %v2139, 0.0
        %v2212 = vmax.f32 %v2141, 0.0
        %v2213 = vmax.f32 %v2145, 0.0
        %v2214 = vmax.f32 %v2147, 0.0
        %v2215 = vmax.f32 %v2149, 0.0
        %v2216 = vmax.f32 %v2151, 0.0
        %v2217 = vpack.c.bf16 %v2155, %v2153
        %v2218 = vpack.c.bf16 %v2156, %v2154
        %v2219 = vpack.c.bf16 %v2159, %v2157
        %v2220 = vpack.c.bf16 %v2160, %v2158
        %v2221 = vpack.c.bf16 %v2163, %v2161
        %v2222 = vpack.c.bf16 %v2164, %v2162
        %v2223 = vpack.c.bf16 %v2167, %v2165
        %v2224 = vpack.c.bf16 %v2168, %v2166
        %v2225 = vpack.c.bf16 %v2171, %v2169
        %v2226 = vpack.c.bf16 %v2172, %v2170
        %v2227 = vpack.c.bf16 %v2175, %v2173
        %v2228 = vpack.c.bf16 %v2176, %v2174
        %v2229 = vpack.c.bf16 %v2179, %v2177
        %v2230 = vpack.c.bf16 %v2180, %v2178
        %v2231 = vpack.c.bf16 %v2183, %v2181
        %v2232 = vpack.c.bf16 %v2184, %v2182
        %v2233 = vpack.c.bf16 %v2187, %v2185
        %v2234 = vpack.c.bf16 %v2188, %v2186
        %v2235 = vpack.c.bf16 %v2191, %v2189
        %v2236 = vpack.c.bf16 %v2192, %v2190
        %v2237 = vpack.c.bf16 %v2195, %v2193
        %v2238 = vpack.c.bf16 %v2196, %v2194
        %v2239 = vpack.c.bf16 %v2199, %v2197
        %v2240 = vpack.c.bf16 %v2200, %v2198
        %v2241 = vpack.c.bf16 %v2203, %v2201
        %v2242 = vpack.c.bf16 %v2204, %v2202
        %v2243 = vpack.c.bf16 %v2207, %v2205
        %v2244 = vpack.c.bf16 %v2208, %v2206
        %v2245 = vpack.c.bf16 %v2211, %v2209
        %v2246 = vpack.c.bf16 %v2212, %v2210
        %v2247 = vpack.c.bf16 %v2215, %v2213
        %v2248 = vpack.c.bf16 %v2216, %v2214
        %v2249 = vld [vmem:[#allocation16] sm:$0xff]
        %v2250 = vld [vmem:[#allocation16 + $0x8] sm:$0xff]
        %v2251 = vld [vmem:[#allocation16 + $0x10] sm:$0xff]
        %v2252 = vld [vmem:[#allocation16 + $0x18] sm:$0xff]
        %v2253 = vld [vmem:[#allocation16 + $0x20] sm:$0xff]
        %v2254 = vld [vmem:[#allocation16 + $0x28] sm:$0xff]
        %v2255 = vld [vmem:[#allocation16 + $0x30] sm:$0xff]
        %v2256 = vld [vmem:[#allocation16 + $0x38] sm:$0xff]
        %v2257 = vld [vmem:[#allocation16 + $0x40] sm:$0xff]
        %v2258 = vld [vmem:[#allocation16 + $0x48] sm:$0xff]
        %v2259 = vld [vmem:[#allocation16 + $0x50] sm:$0xff]
        %v2260 = vld [vmem:[#allocation16 + $0x58] sm:$0xff]
        %v2261 = vld [vmem:[#allocation16 + $0x60] sm:$0xff]
        %v2262 = vld [vmem:[#allocation16 + $0x68] sm:$0xff]
        %v2263 = vld [vmem:[#allocation16 + $0x70] sm:$0xff]
        %v2264 = vld [vmem:[#allocation16 + $0x78] sm:$0xff]
        %v2265 = vld [vmem:[#allocation16 + $0x80] sm:$0xff]
        %v2266 = vld [vmem:[#allocation16 + $0x88] sm:$0xff]
        %v2267 = vld [vmem:[#allocation16 + $0x90] sm:$0xff]
        %v2268 = vld [vmem:[#allocation16 + $0x98] sm:$0xff]
        %v2269 = vld [vmem:[#allocation16 + $0xa0] sm:$0xff]
        %v2270 = vld [vmem:[#allocation16 + $0xa8] sm:$0xff]
        %v2271 = vld [vmem:[#allocation16 + $0xb0] sm:$0xff]
        %v2272 = vld [vmem:[#allocation16 + $0xb8] sm:$0xff]
        %v2273 = vld [vmem:[#allocation16 + $0xc0] sm:$0xff]
        %v2274 = vld [vmem:[#allocation16 + $0xc8] sm:$0xff]
        %v2275 = vld [vmem:[#allocation16 + $0xd0] sm:$0xff]
        %v2276 = vld [vmem:[#allocation16 + $0xd8] sm:$0xff]
        %v2277 = vld [vmem:[#allocation16 + $0xe0] sm:$0xff]
        %v2278 = vld [vmem:[#allocation16 + $0xe8] sm:$0xff]
        %v2279 = vld [vmem:[#allocation16 + $0xf0] sm:$0xff]
        %v2280 = vld [vmem:[#allocation16 + $0xf8] sm:$0xff]
        %v2281 = vld [vmem:[#allocation17] sm:$0x3]
        %v2283 = vlaneseq
        %v2284 = vshrl.u32 %v2283, 7
        %v2285 = vsub.s32 0, %v2284
        %v2286 = vrot.slane %v2281, %v2285
        %v2287 = vlaneseq
        %v2288 = vshrl.u32 %v2287, 7
        %v2289 = vsub.s32 1, %v2288
        %v2290 = vrot.slane %v2281, %v2289
        %v2325 = vunpack.c.l.b16 %v2249
        %v2326 = vunpack.c.h.b16 %v2249
        %v2327 = vunpack.c.l.b16 %v2250
        %v2328 = vunpack.c.h.b16 %v2250
        %v2329 = vunpack.c.l.b16 %v2251
        %v2330 = vunpack.c.h.b16 %v2251
        %v2331 = vunpack.c.l.b16 %v2252
        %v2332 = vunpack.c.h.b16 %v2252
        %v2333 = vunpack.c.l.b16 %v2253
        %v2334 = vunpack.c.h.b16 %v2253
        %v2335 = vunpack.c.l.b16 %v2254
        %v2336 = vunpack.c.h.b16 %v2254
        %v2337 = vunpack.c.l.b16 %v2255
        %v2338 = vunpack.c.h.b16 %v2255
        %v2339 = vunpack.c.l.b16 %v2256
        %v2340 = vunpack.c.h.b16 %v2256
        %v2341 = vunpack.c.l.b16 %v2257
        %v2342 = vunpack.c.h.b16 %v2257
        %v2343 = vunpack.c.l.b16 %v2258
        %v2344 = vunpack.c.h.b16 %v2258
        %v2345 = vunpack.c.l.b16 %v2259
        %v2346 = vunpack.c.h.b16 %v2259
        %v2347 = vunpack.c.l.b16 %v2260
        %v2348 = vunpack.c.h.b16 %v2260
        %v2349 = vunpack.c.l.b16 %v2261
        %v2350 = vunpack.c.h.b16 %v2261
        %v2351 = vunpack.c.l.b16 %v2262
        %v2352 = vunpack.c.h.b16 %v2262
        %v2353 = vunpack.c.l.b16 %v2263
        %v2354 = vunpack.c.h.b16 %v2263
        %v2355 = vunpack.c.l.b16 %v2264
        %v2356 = vunpack.c.h.b16 %v2264
        %v2357 = vunpack.c.l.b16 %v2265
        %v2358 = vunpack.c.h.b16 %v2265
        %v2359 = vunpack.c.l.b16 %v2266
        %v2360 = vunpack.c.h.b16 %v2266
        %v2361 = vunpack.c.l.b16 %v2267
        %v2362 = vunpack.c.h.b16 %v2267
        %v2363 = vunpack.c.l.b16 %v2268
        %v2364 = vunpack.c.h.b16 %v2268
        %v2365 = vunpack.c.l.b16 %v2269
        %v2366 = vunpack.c.h.b16 %v2269
        %v2367 = vunpack.c.l.b16 %v2270
        %v2368 = vunpack.c.h.b16 %v2270
        %v2369 = vunpack.c.l.b16 %v2271
        %v2370 = vunpack.c.h.b16 %v2271
        %v2371 = vunpack.c.l.b16 %v2272
        %v2372 = vunpack.c.h.b16 %v2272
        %v2373 = vunpack.c.l.b16 %v2273
        %v2374 = vunpack.c.h.b16 %v2273
        %v2375 = vunpack.c.l.b16 %v2274
        %v2376 = vunpack.c.h.b16 %v2274
        %v2377 = vunpack.c.l.b16 %v2275
        %v2378 = vunpack.c.h.b16 %v2275
        %v2379 = vunpack.c.l.b16 %v2276
        %v2380 = vunpack.c.h.b16 %v2276
        %v2381 = vunpack.c.l.b16 %v2277
        %v2382 = vunpack.c.h.b16 %v2277
        %v2383 = vunpack.c.l.b16 %v2278
        %v2384 = vunpack.c.h.b16 %v2278
        %v2385 = vunpack.c.l.b16 %v2279
        %v2386 = vunpack.c.h.b16 %v2279
        %v2387 = vunpack.c.l.b16 %v2280
        %v2388 = vunpack.c.h.b16 %v2280
        %v2389 = vpack.c.b16 %v2327, %v2325
        %v2390 = vpack.c.b16 %v2328, %v2326
        %v2391 = vpack.c.b16 %v2331, %v2329
        %v2392 = vpack.c.b16 %v2332, %v2330
        %v2393 = vpack.c.b16 %v2335, %v2333
        %v2394 = vpack.c.b16 %v2336, %v2334
        %v2395 = vpack.c.b16 %v2339, %v2337
        %v2396 = vpack.c.b16 %v2340, %v2338
        %v2397 = vpack.c.b16 %v2343, %v2341
        %v2398 = vpack.c.b16 %v2344, %v2342
        %v2399 = vpack.c.b16 %v2347, %v2345
        %v2400 = vpack.c.b16 %v2348, %v2346
        %v2401 = vpack.c.b16 %v2351, %v2349
        %v2402 = vpack.c.b16 %v2352, %v2350
        %v2403 = vpack.c.b16 %v2355, %v2353
        %v2404 = vpack.c.b16 %v2356, %v2354
        %v2405 = vpack.c.b16 %v2359, %v2357
        %v2406 = vpack.c.b16 %v2360, %v2358
        %v2407 = vpack.c.b16 %v2363, %v2361
        %v2408 = vpack.c.b16 %v2364, %v2362
        %v2409 = vpack.c.b16 %v2367, %v2365
        %v2410 = vpack.c.b16 %v2368, %v2366
        %v2411 = vpack.c.b16 %v2371, %v2369
        %v2412 = vpack.c.b16 %v2372, %v2370
        %v2413 = vpack.c.b16 %v2375, %v2373
        %v2414 = vpack.c.b16 %v2376, %v2374
        %v2415 = vpack.c.b16 %v2379, %v2377
        %v2416 = vpack.c.b16 %v2380, %v2378
        %v2417 = vpack.c.b16 %v2383, %v2381
        %v2418 = vpack.c.b16 %v2384, %v2382
        %v2419 = vpack.c.b16 %v2387, %v2385
        %v2420 = vpack.c.b16 %v2388, %v2386
        %2453 = vmatprep.subr.bf16.mxu0 %v2390
        %2454 = vmatpush1.bf16.msra.mxu0 %v2389
        %2455 = vmatprep.subr.bf16.mxu0 %v2392
        %2456 = vmatpush1.bf16.msra.mxu0 %v2391
        %2457 = vmatprep.subr.bf16.mxu0 %v2394
        %2458 = vmatpush1.bf16.msra.mxu0 %v2393
        %2459 = vmatprep.subr.bf16.mxu0 %v2396
        %2460 = vmatpush1.bf16.msra.mxu0 %v2395
        %2461 = vmatprep.subr.bf16.mxu0 %v2398
        %2462 = vmatpush1.bf16.msra.mxu0 %v2397
        %2463 = vmatprep.subr.bf16.mxu0 %v2400
        %2464 = vmatpush1.bf16.msra.mxu0 %v2399
        %2465 = vmatprep.subr.bf16.mxu0 %v2402
        %2466 = vmatpush1.bf16.msra.mxu0 %v2401
        %2467 = vmatprep.subr.bf16.mxu0 %v2404
        %2468 = vmatpush1.bf16.msra.mxu0 %v2403
        %2469 = vmatprep.subr.bf16.mxu0 %v2406
        %2470 = vmatpush1.bf16.msra.mxu0 %v2405
        %2471 = vmatprep.subr.bf16.mxu0 %v2408
        %2472 = vmatpush1.bf16.msra.mxu0 %v2407
        %2473 = vmatprep.subr.bf16.mxu0 %v2410
        %2474 = vmatpush1.bf16.msra.mxu0 %v2409
        %2475 = vmatprep.subr.bf16.mxu0 %v2412
        %2476 = vmatpush1.bf16.msra.mxu0 %v2411
        %2477 = vmatprep.subr.bf16.mxu0 %v2414
        %2478 = vmatpush1.bf16.msra.mxu0 %v2413
        %2479 = vmatprep.subr.bf16.mxu0 %v2416
        %2480 = vmatpush1.bf16.msra.mxu0 %v2415
        %2481 = vmatprep.subr.bf16.mxu0 %v2418
        %2482 = vmatpush1.bf16.msra.mxu0 %v2417
        %2483 = vmatprep.subr.bf16.mxu0 %v2420
        %2484 = vmatpush1.bf16.msra.mxu0 %v2419
        %2485 = vmatprep.mubr.bf16.mxu0 %v2218
        %2486 = vmatmul.mubr.bf16.gmra.mrb[0].mxu0 %v2217
        %v2487 = vpop.f32.mrb[0].mxu0
        %v2488 = vadd.f32 %v2286, %v2487
        %v2489 = vpop.f32.mrb[0].mxu0
        %v2490 = vadd.f32 %v2290, %v2489
        %v2491 = vpop.f32.mrb[0].mxu0
        %v2492 = vadd.f32 %v2286, %v2491
        %v2493 = vpop.f32.mrb[0].mxu0
        %v2494 = vadd.f32 %v2290, %v2493
        %2495 = vmatprep.mubr.bf16.mxu0 %v2220
        %2496 = vmatmul.mubr.bf16.gmra.mrb[0].mxu0 %v2219
        %v2497 = vpop.f32.mrb[0].mxu0
        %v2498 = vadd.f32 %v2286, %v2497
        %v2499 = vpop.f32.mrb[0].mxu0
        %v2500 = vadd.f32 %v2290, %v2499
        %v2501 = vpop.f32.mrb[0].mxu0
        %v2502 = vadd.f32 %v2286, %v2501
        %v2503 = vpop.f32.mrb[0].mxu0
        %v2504 = vadd.f32 %v2290, %v2503
        %2505 = vmatprep.mubr.bf16.mxu0 %v2222
        %2506 = vmatmul.mubr.bf16.gmra.mrb[0].mxu0 %v2221
        %v2507 = vpop.f32.mrb[0].mxu0
        %v2508 = vadd.f32 %v2286, %v2507
        %v2509 = vpop.f32.mrb[0].mxu0
        %v2510 = vadd.f32 %v2290, %v2509
        %v2511 = vpop.f32.mrb[0].mxu0
        %v2512 = vadd.f32 %v2286, %v2511
        %v2513 = vpop.f32.mrb[0].mxu0
        %v2514 = vadd.f32 %v2290, %v2513
        %2515 = vmatprep.mubr.bf16.mxu0 %v2224
        %2516 = vmatmul.mubr.bf16.gmra.mrb[0].mxu0 %v2223
        %v2517 = vpop.f32.mrb[0].mxu0
        %v2518 = vadd.f32 %v2286, %v2517
        %v2519 = vpop.f32.mrb[0].mxu0
        %v2520 = vadd.f32 %v2290, %v2519
        %v2521 = vpop.f32.mrb[0].mxu0
        %v2522 = vadd.f32 %v2286, %v2521
        %v2523 = vpop.f32.mrb[0].mxu0
        %v2524 = vadd.f32 %v2290, %v2523
        %2525 = vmatprep.mubr.bf16.mxu0 %v2226
        %2526 = vmatmul.mubr.bf16.gmra.mrb[0].mxu0 %v2225
        %v2527 = vpop.f32.mrb[0].mxu0
        %v2528 = vadd.f32 %v2286, %v2527
        %v2529 = vpop.f32.mrb[0].mxu0
        %v2530 = vadd.f32 %v2290, %v2529
        %v2531 = vpop.f32.mrb[0].mxu0
        %v2532 = vadd.f32 %v2286, %v2531
        %v2533 = vpop.f32.mrb[0].mxu0
        %v2534 = vadd.f32 %v2290, %v2533
        %2535 = vmatprep.mubr.bf16.mxu0 %v2228
        %2536 = vmatmul.mubr.bf16.gmra.mrb[0].mxu0 %v2227
        %v2537 = vpop.f32.mrb[0].mxu0
        %v2538 = vadd.f32 %v2286, %v2537
        %v2539 = vpop.f32.mrb[0].mxu0
        %v2540 = vadd.f32 %v2290, %v2539
        %v2541 = vpop.f32.mrb[0].mxu0
        %v2542 = vadd.f32 %v2286, %v2541
        %v2543 = vpop.f32.mrb[0].mxu0
        %v2544 = vadd.f32 %v2290, %v2543
        %2545 = vmatprep.mubr.bf16.mxu0 %v2230
        %2546 = vmatmul.mubr.bf16.gmra.mrb[0].mxu0 %v2229
        %v2547 = vpop.f32.mrb[0].mxu0
        %v2548 = vadd.f32 %v2286, %v2547
        %v2549 = vpop.f32.mrb[0].mxu0
        %v2550 = vadd.f32 %v2290, %v2549
        %v2551 = vpop.f32.mrb[0].mxu0
        %v2552 = vadd.f32 %v2286, %v2551
        %v2553 = vpop.f32.mrb[0].mxu0
        %v2554 = vadd.f32 %v2290, %v2553
        %2555 = vmatprep.mubr.bf16.mxu0 %v2232
        %2556 = vmatmul.mubr.bf16.gmra.mrb[0].mxu0 %v2231
        %v2557 = vpop.f32.mrb[0].mxu0
        %v2558 = vadd.f32 %v2286, %v2557
        %v2559 = vpop.f32.mrb[0].mxu0
        %v2560 = vadd.f32 %v2290, %v2559
        %v2561 = vpop.f32.mrb[0].mxu0
        %v2562 = vadd.f32 %v2286, %v2561
        %v2563 = vpop.f32.mrb[0].mxu0
        %v2564 = vadd.f32 %v2290, %v2563
        %2565 = vmatprep.mubr.bf16.mxu0 %v2234
        %2566 = vmatmul.mubr.bf16.gmra.mrb[0].mxu0 %v2233
        %v2567 = vpop.f32.mrb[0].mxu0
        %v2568 = vadd.f32 %v2286, %v2567
        %v2569 = vpop.f32.mrb[0].mxu0
        %v2570 = vadd.f32 %v2290, %v2569
        %v2571 = vpop.f32.mrb[0].mxu0
        %v2572 = vadd.f32 %v2286, %v2571
        %v2573 = vpop.f32.mrb[0].mxu0
        %v2574 = vadd.f32 %v2290, %v2573
        %2575 = vmatprep.mubr.bf16.mxu0 %v2236
        %2576 = vmatmul.mubr.bf16.gmra.mrb[0].mxu0 %v2235
        %v2577 = vpop.f32.mrb[0].mxu0
        %v2578 = vadd.f32 %v2286, %v2577
        %v2579 = vpop.f32.mrb[0].mxu0
        %v2580 = vadd.f32 %v2290, %v2579
        %v2581 = vpop.f32.mrb[0].mxu0
        %v2582 = vadd.f32 %v2286, %v2581
        %v2583 = vpop.f32.mrb[0].mxu0
        %v2584 = vadd.f32 %v2290, %v2583
        %2585 = vmatprep.mubr.bf16.mxu0 %v2238
        %2586 = vmatmul.mubr.bf16.gmra.mrb[0].mxu0 %v2237
        %v2587 = vpop.f32.mrb[0].mxu0
        %v2588 = vadd.f32 %v2286, %v2587
        %v2589 = vpop.f32.mrb[0].mxu0
        %v2590 = vadd.f32 %v2290, %v2589
        %v2591 = vpop.f32.mrb[0].mxu0
        %v2592 = vadd.f32 %v2286, %v2591
        %v2593 = vpop.f32.mrb[0].mxu0
        %v2594 = vadd.f32 %v2290, %v2593
        %2595 = vmatprep.mubr.bf16.mxu0 %v2240
        %2596 = vmatmul.mubr.bf16.gmra.mrb[0].mxu0 %v2239
        %v2597 = vpop.f32.mrb[0].mxu0
        %v2598 = vadd.f32 %v2286, %v2597
        %v2599 = vpop.f32.mrb[0].mxu0
        %v2600 = vadd.f32 %v2290, %v2599
        %v2601 = vpop.f32.mrb[0].mxu0
        %v2602 = vadd.f32 %v2286, %v2601
        %v2603 = vpop.f32.mrb[0].mxu0
        %v2604 = vadd.f32 %v2290, %v2603
        %2605 = vmatprep.mubr.bf16.mxu0 %v2242
        %2606 = vmatmul.mubr.bf16.gmra.mrb[0].mxu0 %v2241
        %v2607 = vpop.f32.mrb[0].mxu0
        %v2608 = vadd.f32 %v2286, %v2607
        %v2609 = vpop.f32.mrb[0].mxu0
        %v2610 = vadd.f32 %v2290, %v2609
        %v2611 = vpop.f32.mrb[0].mxu0
        %v2612 = vadd.f32 %v2286, %v2611
        %v2613 = vpop.f32.mrb[0].mxu0
        %v2614 = vadd.f32 %v2290, %v2613
        %2615 = vmatprep.mubr.bf16.mxu0 %v2244
        %2616 = vmatmul.mubr.bf16.gmra.mrb[0].mxu0 %v2243
        %v2617 = vpop.f32.mrb[0].mxu0
        %v2618 = vadd.f32 %v2286, %v2617
        %v2619 = vpop.f32.mrb[0].mxu0
        %v2620 = vadd.f32 %v2290, %v2619
        %v2621 = vpop.f32.mrb[0].mxu0
        %v2622 = vadd.f32 %v2286, %v2621
        %v2623 = vpop.f32.mrb[0].mxu0
        %v2624 = vadd.f32 %v2290, %v2623
        %2625 = vmatprep.mubr.bf16.mxu0 %v2246
        %2626 = vmatmul.mubr.bf16.gmra.mrb[0].mxu0 %v2245
        %v2627 = vpop.f32.mrb[0].mxu0
        %v2628 = vadd.f32 %v2286, %v2627
        %v2629 = vpop.f32.mrb[0].mxu0
        %v2630 = vadd.f32 %v2290, %v2629
        %v2631 = vpop.f32.mrb[0].mxu0
        %v2632 = vadd.f32 %v2286, %v2631
        %v2633 = vpop.f32.mrb[0].mxu0
        %v2634 = vadd.f32 %v2290, %v2633
        %2635 = vmatprep.mubr.bf16.mxu0 %v2248
        %2636 = vmatmul.mubr.bf16.gmra.mrb[0].mxu0 %v2247
        %v2637 = vpop.f32.mrb[0].mxu0
        %v2638 = vadd.f32 %v2286, %v2637
        %v2639 = vpop.f32.mrb[0].mxu0
        %v2640 = vadd.f32 %v2290, %v2639
        %v2641 = vpop.f32.mrb[0].mxu0
        %v2642 = vadd.f32 %v2286, %v2641
        %v2643 = vpop.f32.mrb[0].mxu0
        %v2644 = vadd.f32 %v2290, %v2643
        %2645 = vdwg.mxu0
        %v2646 = vpack.c.bf16 %v2492, %v2488
        %v2647 = vpack.c.bf16 %v2494, %v2490
        %v2648 = vpack.c.bf16 %v2502, %v2498
        %v2649 = vpack.c.bf16 %v2504, %v2500
        %v2650 = vpack.c.bf16 %v2512, %v2508
        %v2651 = vpack.c.bf16 %v2514, %v2510
        %v2652 = vpack.c.bf16 %v2522, %v2518
        %v2653 = vpack.c.bf16 %v2524, %v2520
        %v2654 = vpack.c.bf16 %v2532, %v2528
        %v2655 = vpack.c.bf16 %v2534, %v2530
        %v2656 = vpack.c.bf16 %v2542, %v2538
        %v2657 = vpack.c.bf16 %v2544, %v2540
        %v2658 = vpack.c.bf16 %v2552, %v2548
        %v2659 = vpack.c.bf16 %v2554, %v2550
        %v2660 = vpack.c.bf16 %v2562, %v2558
        %v2661 = vpack.c.bf16 %v2564, %v2560
        %v2662 = vpack.c.bf16 %v2572, %v2568
        %v2663 = vpack.c.bf16 %v2574, %v2570
        %v2664 = vpack.c.bf16 %v2582, %v2578
        %v2665 = vpack.c.bf16 %v2584, %v2580
        %v2666 = vpack.c.bf16 %v2592, %v2588
        %v2667 = vpack.c.bf16 %v2594, %v2590
        %v2668 = vpack.c.bf16 %v2602, %v2598
        %v2669 = vpack.c.bf16 %v2604, %v2600
        %v2670 = vpack.c.bf16 %v2612, %v2608
        %v2671 = vpack.c.bf16 %v2614, %v2610
        %v2672 = vpack.c.bf16 %v2622, %v2618
        %v2673 = vpack.c.bf16 %v2624, %v2620
        %v2674 = vpack.c.bf16 %v2632, %v2628
        %v2675 = vpack.c.bf16 %v2634, %v2630
        %v2676 = vpack.c.bf16 %v2642, %v2638
        %v2677 = vpack.c.bf16 %v2644, %v2640
        %v2710 = vunpack.c.l.b16 %v2646
        %v2711 = vunpack.c.l.b16 %v2647
        %v2712 = vunpack.c.h.b16 %v2646
        %v2713 = vunpack.c.h.b16 %v2647
        %v2714 = vunpack.c.l.b16 %v2648
        %v2715 = vunpack.c.l.b16 %v2649
        %v2716 = vunpack.c.h.b16 %v2648
        %v2717 = vunpack.c.h.b16 %v2649
        %v2718 = vunpack.c.l.b16 %v2650
        %v2719 = vunpack.c.l.b16 %v2651
        %v2720 = vunpack.c.h.b16 %v2650
        %v2721 = vunpack.c.h.b16 %v2651
        %v2722 = vunpack.c.l.b16 %v2652
        %v2723 = vunpack.c.l.b16 %v2653
        %v2724 = vunpack.c.h.b16 %v2652
        %v2725 = vunpack.c.h.b16 %v2653
        %v2726 = vunpack.c.l.b16 %v2654
        %v2727 = vunpack.c.l.b16 %v2655
        %v2728 = vunpack.c.h.b16 %v2654
        %v2729 = vunpack.c.h.b16 %v2655
        %v2730 = vunpack.c.l.b16 %v2656
        %v2731 = vunpack.c.l.b16 %v2657
        %v2732 = vunpack.c.h.b16 %v2656
        %v2733 = vunpack.c.h.b16 %v2657
        %v2734 = vunpack.c.l.b16 %v2658
        %v2735 = vunpack.c.l.b16 %v2659
        %v2736 = vunpack.c.h.b16 %v2658
        %v2737 = vunpack.c.h.b16 %v2659
        %v2738 = vunpack.c.l.b16 %v2660
        %v2739 = vunpack.c.l.b16 %v2661
        %v2740 = vunpack.c.h.b16 %v2660
        %v2741 = vunpack.c.h.b16 %v2661
        %v2742 = vunpack.c.l.b16 %v2662
        %v2743 = vunpack.c.l.b16 %v2663
        %v2744 = vunpack.c.h.b16 %v2662
        %v2745 = vunpack.c.h.b16 %v2663
        %v2746 = vunpack.c.l.b16 %v2664
        %v2747 = vunpack.c.l.b16 %v2665
        %v2748 = vunpack.c.h.b16 %v2664
        %v2749 = vunpack.c.h.b16 %v2665
        %v2750 = vunpack.c.l.b16 %v2666
        %v2751 = vunpack.c.l.b16 %v2667
        %v2752 = vunpack.c.h.b16 %v2666
        %v2753 = vunpack.c.h.b16 %v2667
        %v2754 = vunpack.c.l.b16 %v2668
        %v2755 = vunpack.c.l.b16 %v2669
        %v2756 = vunpack.c.h.b16 %v2668
        %v2757 = vunpack.c.h.b16 %v2669
        %v2758 = vunpack.c.l.b16 %v2670
        %v2759 = vunpack.c.l.b16 %v2671
        %v2760 = vunpack.c.h.b16 %v2670
        %v2761 = vunpack.c.h.b16 %v2671
        %v2762 = vunpack.c.l.b16 %v2672
        %v2763 = vunpack.c.l.b16 %v2673
        %v2764 = vunpack.c.h.b16 %v2672
        %v2765 = vunpack.c.h.b16 %v2673
        %v2766 = vunpack.c.l.b16 %v2674
        %v2767 = vunpack.c.l.b16 %v2675
        %v2768 = vunpack.c.h.b16 %v2674
        %v2769 = vunpack.c.h.b16 %v2675
        %v2770 = vunpack.c.l.b16 %v2676
        %v2771 = vunpack.c.l.b16 %v2677
        %v2772 = vunpack.c.h.b16 %v2676
        %v2773 = vunpack.c.h.b16 %v2677
        %v2774 = vpack.c.b16 %v2711, %v2710
        %v2775 = vpack.c.b16 %v2713, %v2712
        %v2776 = vpack.c.b16 %v2715, %v2714
        %v2777 = vpack.c.b16 %v2717, %v2716
        %v2778 = vpack.c.b16 %v2719, %v2718
        %v2779 = vpack.c.b16 %v2721, %v2720
        %v2780 = vpack.c.b16 %v2723, %v2722
        %v2781 = vpack.c.b16 %v2725, %v2724
        %v2782 = vpack.c.b16 %v2727, %v2726
        %v2783 = vpack.c.b16 %v2729, %v2728
        %v2784 = vpack.c.b16 %v2731, %v2730
        %v2785 = vpack.c.b16 %v2733, %v2732
        %v2786 = vpack.c.b16 %v2735, %v2734
        %v2787 = vpack.c.b16 %v2737, %v2736
        %v2788 = vpack.c.b16 %v2739, %v2738
        %v2789 = vpack.c.b16 %v2741, %v2740
        %v2790 = vpack.c.b16 %v2743, %v2742
        %v2791 = vpack.c.b16 %v2745, %v2744
        %v2792 = vpack.c.b16 %v2747, %v2746
        %v2793 = vpack.c.b16 %v2749, %v2748
        %v2794 = vpack.c.b16 %v2751, %v2750
        %v2795 = vpack.c.b16 %v2753, %v2752
        %v2796 = vpack.c.b16 %v2755, %v2754
        %v2797 = vpack.c.b16 %v2757, %v2756
        %v2798 = vpack.c.b16 %v2759, %v2758
        %v2799 = vpack.c.b16 %v2761, %v2760
        %v2800 = vpack.c.b16 %v2763, %v2762
        %v2801 = vpack.c.b16 %v2765, %v2764
        %v2802 = vpack.c.b16 %v2767, %v2766
        %v2803 = vpack.c.b16 %v2769, %v2768
        %v2804 = vpack.c.b16 %v2771, %v2770
        %v2805 = vpack.c.b16 %v2773, %v2772
        %2838 = vst [vmem:[%s557] sm:$0xff] %v2774
        %2839 = vst [vmem:[%s557 + $0x8] sm:$0xff] %v2775
        %2840 = vst [vmem:[%s557 + $0x10] sm:$0xff] %v2776
        %2841 = vst [vmem:[%s557 + $0x18] sm:$0xff] %v2777
        %2842 = vst [vmem:[%s557 + $0x20] sm:$0xff] %v2778
        %2843 = vst [vmem:[%s557 + $0x28] sm:$0xff] %v2779
        %2844 = vst [vmem:[%s557 + $0x30] sm:$0xff] %v2780
        %2845 = vst [vmem:[%s557 + $0x38] sm:$0xff] %v2781
        %2846 = vst [vmem:[%s557 + $0x40] sm:$0xff] %v2782
        %2847 = vst [vmem:[%s557 + $0x48] sm:$0xff] %v2783
        %2848 = vst [vmem:[%s557 + $0x50] sm:$0xff] %v2784
        %2849 = vst [vmem:[%s557 + $0x58] sm:$0xff] %v2785
        %2850 = vst [vmem:[%s557 + $0x60] sm:$0xff] %v2786
        %2851 = vst [vmem:[%s557 + $0x68] sm:$0xff] %v2787
        %2852 = vst [vmem:[%s557 + $0x70] sm:$0xff] %v2788
        %2853 = vst [vmem:[%s557 + $0x78] sm:$0xff] %v2789
        %2854 = vst [vmem:[%s557 + $0x80] sm:$0xff] %v2790
        %2855 = vst [vmem:[%s557 + $0x88] sm:$0xff] %v2791
        %2856 = vst [vmem:[%s557 + $0x90] sm:$0xff] %v2792
        %2857 = vst [vmem:[%s557 + $0x98] sm:$0xff] %v2793
        %2858 = vst [vmem:[%s557 + $0xa0] sm:$0xff] %v2794
        %2859 = vst [vmem:[%s557 + $0xa8] sm:$0xff] %v2795
        %2860 = vst [vmem:[%s557 + $0xb0] sm:$0xff] %v2796
        %2861 = vst [vmem:[%s557 + $0xb8] sm:$0xff] %v2797
        %2862 = vst [vmem:[%s557 + $0xc0] sm:$0xff] %v2798
        %2863 = vst [vmem:[%s557 + $0xc8] sm:$0xff] %v2799
        %2864 = vst [vmem:[%s557 + $0xd0] sm:$0xff] %v2800
        %2865 = vst [vmem:[%s557 + $0xd8] sm:$0xff] %v2801
        %2866 = vst [vmem:[%s557 + $0xe0] sm:$0xff] %v2802
        %2867 = vst [vmem:[%s557 + $0xe8] sm:$0xff] %v2803
        %2868 = vst [vmem:[%s557 + $0xf0] sm:$0xff] %v2804
        %2869 = vst [vmem:[%s557 + $0xf8] sm:$0xff] %v2805
        %2902 = vrot.lane.b32.xlu0 %v1425, 16
        %v2903 = vpop.permute.xlu0 %2902
        %2904 = vrot.lane.b32.xlu0 %v1428, 16
        %v2905 = vpop.permute.xlu0 %2904
        %2906 = vrot.lane.b32.xlu0 %v1433, 16
        %v2907 = vpop.permute.xlu0 %2906
        %2908 = vrot.lane.b32.xlu0 %v1436, 16
        %v2909 = vpop.permute.xlu0 %2908
        %2910 = vrot.lane.b32.xlu0 %v1441, 16
        %v2911 = vpop.permute.xlu0 %2910
        %2912 = vrot.lane.b32.xlu0 %v1444, 16
        %v2913 = vpop.permute.xlu0 %2912
        %2914 = vrot.lane.b32.xlu0 %v1449, 16
        %v2915 = vpop.permute.xlu0 %2914
        %2916 = vrot.lane.b32.xlu0 %v1452, 16
        %v2917 = vpop.permute.xlu0 %2916
        %2918 = vrot.lane.b32.xlu0 %v1457, 16
        %v2919 = vpop.permute.xlu0 %2918
        %2920 = vrot.lane.b32.xlu0 %v1460, 16
        %v2921 = vpop.permute.xlu0 %2920
        %2922 = vrot.lane.b32.xlu0 %v1465, 16
        %v2923 = vpop.permute.xlu0 %2922
        %2924 = vrot.lane.b32.xlu0 %v1468, 16
        %v2925 = vpop.permute.xlu0 %2924
        %2926 = vrot.lane.b32.xlu0 %v1473, 16
        %v2927 = vpop.permute.xlu0 %2926
        %2928 = vrot.lane.b32.xlu0 %v1476, 16
        %v2929 = vpop.permute.xlu0 %2928
        %2930 = vrot.lane.b32.xlu0 %v1481, 16
        %v2931 = vpop.permute.xlu0 %2930
        %2932 = vrot.lane.b32.xlu0 %v1484, 16
        %v2933 = vpop.permute.xlu0 %2932
        %2934 = vrot.lane.b32.xlu0 %v1489, 16
        %v2935 = vpop.permute.xlu0 %2934
        %2936 = vrot.lane.b32.xlu0 %v1492, 16
        %v2937 = vpop.permute.xlu0 %2936
        %2938 = vrot.lane.b32.xlu0 %v1497, 16
        %v2939 = vpop.permute.xlu0 %2938
        %2940 = vrot.lane.b32.xlu0 %v1500, 16
        %v2941 = vpop.permute.xlu0 %2940
        %2942 = vrot.lane.b32.xlu0 %v1505, 16
        %v2943 = vpop.permute.xlu0 %2942
        %2944 = vrot.lane.b32.xlu0 %v1508, 16
        %v2945 = vpop.permute.xlu0 %2944
        %2946 = vrot.lane.b32.xlu0 %v1513, 16
        %v2947 = vpop.permute.xlu0 %2946
        %2948 = vrot.lane.b32.xlu0 %v1516, 16
        %v2949 = vpop.permute.xlu0 %2948
        %2950 = vrot.lane.b32.xlu0 %v1521, 16
        %v2951 = vpop.permute.xlu0 %2950
        %2952 = vrot.lane.b32.xlu0 %v1524, 16
        %v2953 = vpop.permute.xlu0 %2952
        %2954 = vrot.lane.b32.xlu0 %v1529, 16
        %v2955 = vpop.permute.xlu0 %2954
        %2956 = vrot.lane.b32.xlu0 %v1532, 16
        %v2957 = vpop.permute.xlu0 %2956
        %2958 = vrot.lane.b32.xlu0 %v1537, 16
        %v2959 = vpop.permute.xlu0 %2958
        %2960 = vrot.lane.b32.xlu0 %v1540, 16
        %v2961 = vpop.permute.xlu0 %2960
        %2962 = vrot.lane.b32.xlu0 %v1545, 16
        %v2963 = vpop.permute.xlu0 %2962
        %2964 = vrot.lane.b32.xlu0 %v1548, 16
        %v2965 = vpop.permute.xlu0 %2964
        %v2998 = vsel %vm1911, %v1839, %v2903
        %v2999 = vsel %vm1911, %v1840, %v2905
        %v3000 = vsel %vm1911, %v1841, %v2907
        %v3001 = vsel %vm1911, %v1842, %v2909
        %v3002 = vsel %vm1911, %v1843, %v2911
        %v3003 = vsel %vm1911, %v1844, %v2913
        %v3004 = vsel %vm1911, %v1845, %v2915
        %v3005 = vsel %vm1911, %v1846, %v2917
        %v3006 = vsel %vm1911, %v1847, %v2919
        %v3007 = vsel %vm1911, %v1848, %v2921
        %v3008 = vsel %vm1911, %v1849, %v2923
        %v3009 = vsel %vm1911, %v1850, %v2925
        %v3010 = vsel %vm1911, %v1851, %v2927
        %v3011 = vsel %vm1911, %v1852, %v2929
        %v3012 = vsel %vm1911, %v1853, %v2931
        %v3013 = vsel %vm1911, %v1854, %v2933
        %v3014 = vsel %vm1911, %v1855, %v2935
        %v3015 = vsel %vm1911, %v1856, %v2937
        %v3016 = vsel %vm1911, %v1857, %v2939
        %v3017 = vsel %vm1911, %v1858, %v2941
        %v3018 = vsel %vm1911, %v1859, %v2943
        %v3019 = vsel %vm1911, %v1860, %v2945
        %v3020 = vsel %vm1911, %v1861, %v2947
        %v3021 = vsel %vm1911, %v1862, %v2949
        %v3022 = vsel %vm1911, %v1863, %v2951
        %v3023 = vsel %vm1911, %v1864, %v2953
        %v3024 = vsel %vm1911, %v1865, %v2955
        %v3025 = vsel %vm1911, %v1866, %v2957
        %v3026 = vsel %vm1911, %v1867, %v2959
        %v3027 = vsel %vm1911, %v1868, %v2961
        %v3028 = vsel %vm1911, %v1869, %v2963
        %v3029 = vsel %vm1911, %v1870, %v2965
        %vm3030 = vcmask 392192
        %v3031 = vsel %vm3030, %v2998, 0.0
        %v3032 = vsel %vm3030, %v2999, 0.0
        %v3033 = vsel %vm3030, %v3000, 0.0
        %v3034 = vsel %vm3030, %v3001, 0.0
        %v3035 = vsel %vm3030, %v3002, 0.0
        %v3036 = vsel %vm3030, %v3003, 0.0
        %v3037 = vsel %vm3030, %v3004, 0.0
        %v3038 = vsel %vm3030, %v3005, 0.0
        %v3039 = vsel %vm3030, %v3006, 0.0
        %v3040 = vsel %vm3030, %v3007, 0.0
        %v3041 = vsel %vm3030, %v3008, 0.0
        %v3042 = vsel %vm3030, %v3009, 0.0
        %v3043 = vsel %vm3030, %v3010, 0.0
        %v3044 = vsel %vm3030, %v3011, 0.0
        %v3045 = vsel %vm3030, %v3012, 0.0
        %v3046 = vsel %vm3030, %v3013, 0.0
        %v3047 = vsel %vm3030, %v3014, 0.0
        %v3048 = vsel %vm3030, %v3015, 0.0
        %v3049 = vsel %vm3030, %v3016, 0.0
        %v3050 = vsel %vm3030, %v3017, 0.0
        %v3051 = vsel %vm3030, %v3018, 0.0
        %v3052 = vsel %vm3030, %v3019, 0.0
        %v3053 = vsel %vm3030, %v3020, 0.0
        %v3054 = vsel %vm3030, %v3021, 0.0
        %v3055 = vsel %vm3030, %v3022, 0.0
        %v3056 = vsel %vm3030, %v3023, 0.0
        %v3057 = vsel %vm3030, %v3024, 0.0
        %v3058 = vsel %vm3030, %v3025, 0.0
        %v3059 = vsel %vm3030, %v3026, 0.0
        %v3060 = vsel %vm3030, %v3027, 0.0
        %v3061 = vsel %vm3030, %v3028, 0.0
        %v3062 = vsel %vm3030, %v3029, 0.0
        %3063 = vst [vmem:[%s564] sm:$0xff] %v3031
        %3064 = vst [vmem:[%s564 + $0x8] sm:$0xff] %v3032
        %3065 = vst [vmem:[%s564 + $0x10] sm:$0xff] %v3033
        %3066 = vst [vmem:[%s564 + $0x18] sm:$0xff] %v3034
        %3067 = vst [vmem:[%s564 + $0x20] sm:$0xff] %v3035
        %3068 = vst [vmem:[%s564 + $0x28] sm:$0xff] %v3036
        %3069 = vst [vmem:[%s564 + $0x30] sm:$0xff] %v3037
        %3070 = vst [vmem:[%s564 + $0x38] sm:$0xff] %v3038
        %3071 = vst [vmem:[%s564 + $0x40] sm:$0xff] %v3039
        %3072 = vst [vmem:[%s564 + $0x48] sm:$0xff] %v3040
        %3073 = vst [vmem:[%s564 + $0x50] sm:$0xff] %v3041
        %3074 = vst [vmem:[%s564 + $0x58] sm:$0xff] %v3042
        %3075 = vst [vmem:[%s564 + $0x60] sm:$0xff] %v3043
        %3076 = vst [vmem:[%s564 + $0x68] sm:$0xff] %v3044
        %3077 = vst [vmem:[%s564 + $0x70] sm:$0xff] %v3045
        %3078 = vst [vmem:[%s564 + $0x78] sm:$0xff] %v3046
        %3079 = vst [vmem:[%s564 + $0x80] sm:$0xff] %v3047
        %3080 = vst [vmem:[%s564 + $0x88] sm:$0xff] %v3048
        %3081 = vst [vmem:[%s564 + $0x90] sm:$0xff] %v3049
        %3082 = vst [vmem:[%s564 + $0x98] sm:$0xff] %v3050
        %3083 = vst [vmem:[%s564 + $0xa0] sm:$0xff] %v3051
        %3084 = vst [vmem:[%s564 + $0xa8] sm:$0xff] %v3052
        %3085 = vst [vmem:[%s564 + $0xb0] sm:$0xff] %v3053
        %3086 = vst [vmem:[%s564 + $0xb8] sm:$0xff] %v3054
        %3087 = vst [vmem:[%s564 + $0xc0] sm:$0xff] %v3055
        %3088 = vst [vmem:[%s564 + $0xc8] sm:$0xff] %v3056
        %3089 = vst [vmem:[%s564 + $0xd0] sm:$0xff] %v3057
        %3090 = vst [vmem:[%s564 + $0xd8] sm:$0xff] %v3058
        %3091 = vst [vmem:[%s564 + $0xe0] sm:$0xff] %v3059
        %3092 = vst [vmem:[%s564 + $0xe8] sm:$0xff] %v3060
        %3093 = vst [vmem:[%s564 + $0xf0] sm:$0xff] %v3061
        %3094 = vst [vmem:[%s564 + $0xf8] sm:$0xff] %v3062
        %s3095 = sand.u32 %s267, 1
        %s3096 = scalar_lea.sflag [#allocation4], %s3095
        %s3097 = sand.u32 %s267, 1
        %s3098 = smul.addr %s3097, 256
        %s3099 = scalar_lea.vmem [#allocation19], %s3098
        %s3100 = sand.u32 %s293, 1
        %s3101 = scalar_lea.sflag [#allocation21], %s3100
        %s3102 = sand.u32 %s293, 1
        %s3103 = smul.addr %s3102, 256
        %s3104 = scalar_lea.vmem [#allocation20], %s3103
        // Predicated region
        $region101: #{tpu_custom_call.1} parent=59 // pred_check
          %p3105 = pneg %p277
        $region102: #{tpu_custom_call.1} parent=59 // pred_check_branch
          %3107 = sbr.rel (%p3105) target = $region104
        $region103: #{tpu_custom_call.1} parent=59 // pred_region
          %s3108 = smul.u32 32, %s39
          %s3110 = ssub.s32 4096, 4096
          %3111 = vsyncadd %s3096, %s3110
          %s3112 = smul.addr %s3108, 2
          %s3113 = smul.addr %s3112, 64
          %s3114 = scalar_lea.hbm %s10, %s3113
          %s3115 = sshll.u32 %s3099, 4
          %s3116 = int_to_ptr.vmem [resolvable:$true] %s3115
          %3121 = dma.vmem_to_hbm [thread:$0]  %s3116, 4096, %s3114, %s3096, 128, 128, 8
        $region104: #{tpu_custom_call.1} parent=59 // pred_fallthru
          _
        // Predicated region
        $region105: #{tpu_custom_call.1} parent=59 // pred_check
          %p3122 = pneg %p303
        $region106: #{tpu_custom_call.1} parent=59 // pred_check_branch
          %3124 = sbr.rel (%p3122) target = $region108
        $region107: #{tpu_custom_call.1} parent=59 // pred_region
          %s3125 = smul.u32 32, %s39
          %s3127 = ssub.s32 4096, 4096
          %3128 = vsyncadd %s3101, %s3127
          %s3129 = smul.addr %s3125, 128
          %s3130 = scalar_lea.hbm %s11, %s3129
          %s3131 = sshll.u32 %s3104, 4
          %s3132 = int_to_ptr.vmem [resolvable:$true] %s3131
          %3137 = dma.vmem_to_hbm [thread:$0]  %s3132, 4096, %s3130, %s3101, 128, 128, 8
        $region108: #{tpu_custom_call.1} parent=59 // pred_fallthru
          _
      $region60: #{tpu_custom_call.1} parent=5 // pred_fallthru
        _
      %p3138 = scmp.le.s32.totalorder 2, %s34
      // Predicated region
      $region109: #{tpu_custom_call.1} parent=5 // pred_check
        %p3139 = pneg %p3138
      $region110: #{tpu_custom_call.1} parent=5 // pred_check_branch
        %3141 = sbr.rel (%p3139) target = $region112
      $region111: #{tpu_custom_call.1} parent=5 // pred_region
        %s3142 = ssub.s32 %s34, 2
        // Predicated region
        $region113: #{tpu_custom_call.1} parent=111 // pred_check
          %p3143 = pneg %p283
        $region114: #{tpu_custom_call.1} parent=111 // pred_check_branch
          %3145 = sbr.rel (%p3143) target = $region116
        $region115: #{tpu_custom_call.1} parent=111 // pred_region
          %s3146 = sand.u32 %s268, 1
          %s3147 = scalar_lea.sflag [#allocation4], %s3146
          %s3148 = sand.u32 %s268, 1
          %s3149 = smul.addr %s3148, 256
          %s3150 = scalar_lea.vmem [#allocation19], %s3149
          %3151 = dma.done %s3147, 4096
        $region116: #{tpu_custom_call.1} parent=111 // pred_fallthru
          _
        // Predicated region
        $region117: #{tpu_custom_call.1} parent=111 // pred_check
          %p3152 = pneg %p309
        $region118: #{tpu_custom_call.1} parent=111 // pred_check_branch
          %3154 = sbr.rel (%p3152) target = $region120
        $region119: #{tpu_custom_call.1} parent=111 // pred_region
          %s3155 = sand.u32 %s294, 1
          %s3156 = scalar_lea.sflag [#allocation21], %s3155
          %s3157 = sand.u32 %s294, 1
          %s3158 = smul.addr %s3157, 256
          %s3159 = scalar_lea.vmem [#allocation20], %s3158
          %3160 = dma.done %s3156, 4096
        $region120: #{tpu_custom_call.1} parent=111 // pred_fallthru
          _
      $region112: #{tpu_custom_call.1} parent=5 // pred_fallthru
        _
    $region6: #{tpu_custom_call.1} parent=1 // loop_footer
      %s38 = sadd.s32 1, %s34
    $region7: #{tpu_custom_call.1} parent=1 // loop_footer_branch
      %33 = sbr.rel target = $region3
    $region8: #{tpu_custom_call.1} parent=1 // loop_exit
      _
    %3161 = vsyncpa [#allocation3], 1
    %s3162 = scalar_lea.sflag [#allocation3], 1
    %3163 = vsyncpa %s3162, 1
    %3164 = vsyncpa [#allocation6], 1
    %s3165 = scalar_lea.sflag [#allocation6], 1
    %3166 = vsyncpa %s3165, 1
    %3167 = vsyncpa [#allocation9], 1
    %3168 = vsyncpa [#allocation12], 1
    %3169 = vsyncpa [#allocation15], 1
    %3170 = vsyncpa [#allocation18], 1
    %3171 = vsyncpa [#allocation4], 1
    %s3172 = scalar_lea.sflag [#allocation4], 1
    %3173 = vsyncpa %s3172, 1
    %3174 = vsyncpa [#allocation21], 1
    %s3175 = scalar_lea.sflag [#allocation21], 1
    %3176 = vsyncpa %s3175, 1

</llo_original>
